<compile_context>
chip_gen: v6e
topology: v6e:2x2x1
jax: 0.10.0
libtpu: 0.0.40
codegen_flags: <defaults>
</compile_context>

<pallas_src>
import jax
import jax.numpy as jnp
import numpy as np
from jax.experimental import pallas as pl
from jax.experimental.pallas import tpu as pltpu

# ----- logical model sizes (match the PyTorch module) -----------------------
NODE_IN_FEATURES = 8
HIDDEN_DIM = 32
NUM_LAYERS = 3

# ----- example problem geometry ---------------------------------------------
NUM_GRAPHS = 2                               # graphs per instance
NODES_PER_GRAPH = 8
N_NODES = NUM_GRAPHS * NODES_PER_GRAPH       # 16 nodes per instance
NUM_INSTANCES = 16                           # independent instances
GROUP = 8                                    # instances fused per grid step
NUM_GROUPS = NUM_INSTANCES // GROUP          # 2 grid steps (>=2 for v7x 2 TCs)

# ----- lane-dense / grouped padded sizes -------------------------------------
H_PAD = 128                                  # padded hidden lanes
M_NODES = GROUP * N_NODES                    # 128 node rows per grid step
GRAPHS_PER_GROUP = GROUP * NUM_GRAPHS        # 16 pooled rows per grid step
POOL_ROWS = ((GRAPHS_PER_GROUP + 7) // 8) * 8  # sublane-padded pool rows
CONST_ROWS = 8   # row0=b_emb, rows1..3=b_convs, row4=w_val row, row5=b_val


# ---------------------------------------------------------------------------
# Kernel: one grid step == one group of GROUP independent instances.
# ---------------------------------------------------------------------------
def critic_gnn_kernel(x_ref, a_ref, pool_ref, w_emb_ref, w_convs_ref,
                      const_ref, out_ref):
    const = const_ref[...]                                    # (8, 128) f32

    # node embedding: h = relu(x @ W_emb + b_emb)   (f32 x f32, K=8)
    h = jnp.dot(x_ref[...], w_emb_ref[...],
                preferred_element_type=jnp.float32)           # (128, 128) f32
    h = jnp.maximum(h + const[0:1, :], 0.0).astype(jnp.bfloat16)

    a = a_ref[...]                                            # (128, 128) bf16

    # GCN layers over the group block-diagonal adjacency:
    #   h = relu(A_norm @ (h @ W_l) + b_l)
    for l in range(NUM_LAYERS):
        hw = jnp.dot(h, w_convs_ref[l],
                     preferred_element_type=jnp.float32)
        agg = jnp.dot(a, hw.astype(jnp.bfloat16),
                      preferred_element_type=jnp.float32)
        h = jnp.maximum(agg + const[l + 1:l + 2, :],
                        0.0).astype(jnp.bfloat16)

    # global mean pool: g = P @ h
    g = jnp.dot(pool_ref[...], h,
                preferred_element_type=jnp.float32)           # (16, 128) f32

    # value head: VPU multiply + lane reduction against the w_val row
    v = jnp.sum(g * const[4:5, :], axis=-1, keepdims=True)    # (16, 1) f32
    # b_val lives in every lane of const row 5 -> lane-dense unmasked store
    out_ref[...] = v + const[5:6, :]


def critic_gnn_forward(x, a, pool, w_emb, w_convs, const):
    """x:(NUM_GROUPS*M_NODES, 8) f32, a:(NUM_GROUPS, M, M) bf16,
    pool:(NUM_GROUPS, POOL_ROWS, M) bf16, w_emb:(8, H_PAD) f32,
    w_convs:(L, H_PAD, H_PAD) bf16, const:(8, H_PAD) f32.
    Returns (NUM_INSTANCES, NUM_GRAPHS, 1) f32."""
    n_groups = a.shape[0]
    out = pl.pallas_call(
        critic_gnn_kernel,
        out_shape=jax.ShapeDtypeStruct((n_groups * POOL_ROWS, H_PAD),
                                       jnp.float32),
        grid_spec=pltpu.PrefetchScalarGridSpec(
            num_scalar_prefetch=0,
            grid=(n_groups,),
            in_specs=[
                pl.BlockSpec((M_NODES, NODE_IN_FEATURES),
                             lambda i: (i, 0)),                       # x
                pl.BlockSpec((None, M_NODES, M_NODES),
                             lambda i: (i, 0, 0)),                    # A_norm
                pl.BlockSpec((None, POOL_ROWS, M_NODES),
                             lambda i: (i, 0, 0)),                    # pool
                pl.BlockSpec((NODE_IN_FEATURES, H_PAD),
                             lambda i: (0, 0)),                       # w_emb
                pl.BlockSpec((NUM_LAYERS, H_PAD, H_PAD),
                             lambda i: (0, 0, 0)),                    # w_convs
                pl.BlockSpec((CONST_ROWS, H_PAD),
                             lambda i: (0, 0)),                       # const
            ],
            out_specs=pl.BlockSpec((POOL_ROWS, H_PAD), lambda i: (i, 0)),
        ),
        compiler_params=pltpu.CompilerParams(
            dimension_semantics=("parallel",)),
    )(x, a, pool, w_emb, w_convs, const)
    # slice lane 0 of the lane-dense slab back to (instances, graphs, 1)
    vals = out.reshape(n_groups, POOL_ROWS, H_PAD)[:, :GRAPHS_PER_GROUP, 0]
    return vals.reshape(n_groups * GROUP, NUM_GRAPHS, 1)


# ---------------------------------------------------------------------------
# Glue (plain JAX): normalized adjacency, block-diag grouping, pool matrix,
# parameter packing, mirroring reference.
# ---------------------------------------------------------------------------
def build_norm_adj(edge_index, num_nodes):
    """PyG GCNConv normalization: D^-1/2 (A + I) D^-1/2, messages src -> dst.
    Scatter-add so duplicate edges accumulate like PyG."""
    src, dst = edge_index[0], edge_index[1]
    a = jnp.zeros((num_nodes, num_nodes), jnp.float32)
    a = a.at[dst, src].add(1.0)
    a = a + jnp.eye(num_nodes, dtype=jnp.float32)
    deg = a.sum(axis=1)
    dinv = jnp.where(deg > 0.0, 1.0 / jnp.sqrt(deg), 0.0)
    return dinv[:, None] * a * dinv[None, :]


def build_group_block_diag(a_inst, group):
    """Block-diagonal adjacency for `group` stacked independent instances."""
    return jax.scipy.linalg.block_diag(*([a_inst] * group))


def build_group_mean_pool(batch_group, num_rows):
    """P[b, n] = 1/|graph b| if node n is in graph b; padded rows are zero."""
    onehot = (batch_group[None, :] == jnp.arange(num_rows)[:, None]
              ).astype(jnp.float32)
    counts = jnp.maximum(onehot.sum(axis=1, keepdims=True), 1.0)
    return onehot / counts


def init_params(key, node_in, hidden, num_layers):
    ks = jax.random.split(key, 6)
    return {
        "w_emb": jax.random.normal(ks[0], (node_in, hidden), jnp.float32) * 0.1,
        "b_emb": jax.random.normal(ks[1], (hidden,), jnp.float32) * 0.01,
        "w_convs": jax.random.normal(ks[2], (num_layers, hidden, hidden),
                                     jnp.float32) * 0.1,
        "b_convs": jax.random.normal(ks[3], (num_layers, hidden),
                                     jnp.float32) * 0.01,
        "w_val": jax.random.normal(ks[4], (hidden, 1), jnp.float32) * 0.1,
        "b_val": jax.random.normal(ks[5], (1,), jnp.float32) * 0.01,
    }


def pack_params(p):
    """Lane-pad weights; w_emb stays f32 (K=8), convs bf16, biases + w_val row
    + b_val consolidated into ONE (8, 128) f32 const tile."""
    h = HIDDEN_DIM
    w_emb = (jnp.zeros((NODE_IN_FEATURES, H_PAD), jnp.float32)
             .at[:, :h].set(p["w_emb"]))
    w_convs = (jnp.zeros((NUM_LAYERS, H_PAD, H_PAD), jnp.float32)
               .at[:, :h, :h].set(p["w_convs"]).astype(jnp.bfloat16))
    const = jnp.zeros((CONST_ROWS, H_PAD), jnp.float32)
    const = const.at[0, :h].set(p["b_emb"])
    const = const.at[1:1 + NUM_LAYERS, :h].set(p["b_convs"])
    const = const.at[4, :h].set(p["w_val"][:, 0])
    const = const.at[5, :].set(p["b_val"][0])
    return w_emb, w_convs, const


def reference_forward(x_f32, a_bf, pool_bf, w_emb, w_convs, const):
    """Pure-JAX reference mirroring the kernel's exact dtype handling."""
    n_groups = a_bf.shape[0]
    outs = []
    for gi in range(n_groups):
        xg = x_f32[gi * M_NODES:(gi + 1) * M_NODES]
        h = jnp.dot(xg, w_emb, preferred_element_type=jnp.float32)
        h = jnp.maximum(h + const[0:1, :], 0.0).astype(jnp.bfloat16)
        for l in range(NUM_LAYERS):
            hw = jnp.dot(h, w_convs[l], preferred_element_type=jnp.float32)
            agg = jnp.dot(a_bf[gi], hw.astype(jnp.bfloat16),
                          preferred_element_type=jnp.float32)
            h = jnp.maximum(agg + const[l + 1:l + 2, :],
                            0.0).astype(jnp.bfloat16)
        g = jnp.dot(pool_bf[gi], h, preferred_element_type=jnp.float32)
        v = (jnp.sum(g * const[4:5, :], axis=-1, keepdims=True)
             + const[5:6, 0:1])
        outs.append(v[:GRAPHS_PER_GROUP])
    return jnp.stack(outs).reshape(n_groups * GROUP, NUM_GRAPHS, 1)


if __name__ == "__main__":
    key = jax.random.PRNGKey(0)
    k_x, k_p = jax.random.split(key)

    # deterministic chain graphs: per instance, NUM_GRAPHS bidirected chains
    src_list, dst_list = [], []
    for g in range(NUM_GRAPHS):
        base = g * NODES_PER_GRAPH
        for i in range(NODES_PER_GRAPH - 1):
            src_list += [base + i, base + i + 1]
            dst_list += [base + i + 1, base + i]
    edge_index = jnp.array([src_list, dst_list], dtype=jnp.int32)
    batch = jnp.repeat(jnp.arange(NUM_GRAPHS, dtype=jnp.int32),
                       NODES_PER_GRAPH)

    a_one = build_norm_adj(edge_index, N_NODES)               # (16, 16)  f32
    a_group = build_group_block_diag(a_one, GROUP)            # (128, 128) f32
    batch_group = jnp.concatenate(
        [batch + j * NUM_GRAPHS for j in range(GROUP)])       # (128,)
    pool_group = build_group_mean_pool(batch_group, POOL_ROWS)  # (16, 128) f32

    # node features for NUM_INSTANCES independent instances
    x = jax.random.normal(
        k_x, (NUM_INSTANCES, N_NODES, NODE_IN_FEATURES), jnp.float32)

    params = init_params(k_p, NODE_IN_FEATURES, HIDDEN_DIM, NUM_LAYERS)
    w_emb, w_convs, const = pack_params(params)

    # pack operands at the pallas_call boundary (no K-padding on x)
    x_grp = x.reshape(NUM_GROUPS * M_NODES, NODE_IN_FEATURES)         # f32
    a_bf = jnp.broadcast_to(
        a_group, (NUM_GROUPS, M_NODES, M_NODES)).astype(jnp.bfloat16)
    pool_bf = jnp.broadcast_to(
        pool_group, (NUM_GROUPS, POOL_ROWS, M_NODES)).astype(jnp.bfloat16)

    values = critic_gnn_forward(x_grp, a_bf, pool_bf, w_emb, w_convs, const)
    values = jax.block_until_ready(values)
    assert values.shape == (NUM_INSTANCES, NUM_GRAPHS, 1)

    ref = reference_forward(x_grp, a_bf, pool_bf, w_emb, w_convs, const)
    np.testing.assert_allclose(np.asarray(values), np.asarray(ref),
                               rtol=2e-2, atol=2e-3)

    print("KERNEL_OK")
</pallas_src>

<mosaic_0001>
module attributes {stable_mosaic.version = 11 : i64} {
  func.func @critic_gnn_kernel(%arg0: i32, %arg1: memref<128x8xf32, #tpu.memory_space<vmem>>, %arg2: memref<1x128x128xbf16, #tpu.memory_space<vmem>>, %arg3: memref<1x16x128xbf16, #tpu.memory_space<vmem>>, %arg4: memref<8x128xf32, #tpu.memory_space<vmem>>, %arg5: memref<3x128x128xbf16, #tpu.memory_space<vmem>>, %arg6: memref<8x128xf32, #tpu.memory_space<vmem>>, %arg7: memref<16x128xf32, #tpu.memory_space<vmem>>) attributes {dimension_semantics = [#tpu.dimension_semantics<parallel>], iteration_bounds = array<i64: 2>, scalar_prefetch = 0 : i64, scratch_operands = 0 : i64, tpu.core_type = #tpu.core_type<tc>, window_params = [{transform_indices = @transform_0, window_bounds = array<i64: 128, 8>}, {transform_indices = @transform_1, window_bounds = array<i64: 1, 128, 128>}, {transform_indices = @transform_2, window_bounds = array<i64: 1, 16, 128>}, {pipeline_mode = #tpu.pipeline_mode<synchronous>, transform_indices = @transform_3, window_bounds = array<i64: 8, 128>}, {pipeline_mode = #tpu.pipeline_mode<synchronous>, transform_indices = @transform_4, window_bounds = array<i64: 3, 128, 128>}, {pipeline_mode = #tpu.pipeline_mode<synchronous>, transform_indices = @transform_5, window_bounds = array<i64: 8, 128>}, {transform_indices = @transform_6, window_bounds = array<i64: 16, 128>}]} {
    %c0 = arith.constant 0 : index
    %c0_0 = arith.constant 0 : index
    %0 = vector.load %arg6[%c0, %c0_0] : memref<8x128xf32, #tpu.memory_space<vmem>>, vector<8x128xf32>
    %c0_1 = arith.constant 0 : index
    %c0_2 = arith.constant 0 : index
    %1 = vector.load %arg1[%c0_1, %c0_2] : memref<128x8xf32, #tpu.memory_space<vmem>>, vector<128x8xf32>
    %c0_3 = arith.constant 0 : index
    %c0_4 = arith.constant 0 : index
    %2 = vector.load %arg4[%c0_3, %c0_4] : memref<8x128xf32, #tpu.memory_space<vmem>>, vector<8x128xf32>
    %cst = arith.constant dense<0.000000e+00> : vector<128x128xf32>
    %3 = tpu.matmul %1, %2, %cst {dimension_numbers = #tpu.dot_dimension_numbers<[1], [0], [0], [1], [0, 0, 1, 1], [], []>} : vector<128x8xf32>, vector<8x128xf32>, vector<128x128xf32> -> vector<128x128xf32>
    %4 = vector.extract_strided_slice %0 {offsets = [0, 0], sizes = [1, 128], strides = [1, 1]} : vector<8x128xf32> to vector<1x128xf32>
    %5 = vector.broadcast %4 : vector<1x128xf32> to vector<128x128xf32>
    %6 = arith.addf %3, %5 : vector<128x128xf32>
    %cst_5 = arith.constant 0.000000e+00 : f32
    %7 = vector.broadcast %cst_5 : f32 to vector<128x128xf32>
    %8 = arith.maximumf %6, %7 : vector<128x128xf32>
    %9 = arith.truncf %8 : vector<128x128xf32> to vector<128x128xbf16>
    %c0_6 = arith.constant 0 : index
    %c0_7 = arith.constant 0 : index
    %c0_8 = arith.constant 0 : index
    %10 = vector.load %arg2[%c0_6, %c0_7, %c0_8] : memref<1x128x128xbf16, #tpu.memory_space<vmem>>, vector<1x128x128xbf16>
    %11 = vector.shape_cast %10 : vector<1x128x128xbf16> to vector<128x128xbf16>
    %c0_9 = arith.constant 0 : index
    %c0_10 = arith.constant 0 : index
    %c0_11 = arith.constant 0 : index
    %12 = vector.load %arg5[%c0_9, %c0_10, %c0_11] : memref<3x128x128xbf16, #tpu.memory_space<vmem>>, vector<1x128x128xbf16>
    %13 = vector.shape_cast %12 : vector<1x128x128xbf16> to vector<128x128xbf16>
    %cst_12 = arith.constant dense<0.000000e+00> : vector<128x128xf32>
    %14 = tpu.matmul %9, %13, %cst_12 {dimension_numbers = #tpu.dot_dimension_numbers<[1], [0], [0], [1], [0, 0, 1, 1], [], []>} : vector<128x128xbf16>, vector<128x128xbf16>, vector<128x128xf32> -> vector<128x128xf32>
    %15 = arith.truncf %14 : vector<128x128xf32> to vector<128x128xbf16>
    %cst_13 = arith.constant dense<0.000000e+00> : vector<128x128xf32>
    %16 = tpu.matmul %11, %15, %cst_13 {dimension_numbers = #tpu.dot_dimension_numbers<[1], [0], [0], [1], [0, 0, 1, 1], [], []>} : vector<128x128xbf16>, vector<128x128xbf16>, vector<128x128xf32> -> vector<128x128xf32>
    %17 = vector.extract_strided_slice %0 {offsets = [1, 0], sizes = [1, 128], strides = [1, 1]} : vector<8x128xf32> to vector<1x128xf32>
    %18 = vector.broadcast %17 : vector<1x128xf32> to vector<128x128xf32>
    %19 = arith.addf %16, %18 : vector<128x128xf32>
    %cst_14 = arith.constant 0.000000e+00 : f32
    %20 = vector.broadcast %cst_14 : f32 to vector<128x128xf32>
    %21 = arith.maximumf %19, %20 : vector<128x128xf32>
    %22 = arith.truncf %21 : vector<128x128xf32> to vector<128x128xbf16>
    %c1 = arith.constant 1 : index
    %c0_15 = arith.constant 0 : index
    %c0_16 = arith.constant 0 : index
    %23 = vector.load %arg5[%c1, %c0_15, %c0_16] : memref<3x128x128xbf16, #tpu.memory_space<vmem>>, vector<1x128x128xbf16>
    %24 = vector.shape_cast %23 : vector<1x128x128xbf16> to vector<128x128xbf16>
    %cst_17 = arith.constant dense<0.000000e+00> : vector<128x128xf32>
    %25 = tpu.matmul %22, %24, %cst_17 {dimension_numbers = #tpu.dot_dimension_numbers<[1], [0], [0], [1], [0, 0, 1, 1], [], []>} : vector<128x128xbf16>, vector<128x128xbf16>, vector<128x128xf32> -> vector<128x128xf32>
    %26 = arith.truncf %25 : vector<128x128xf32> to vector<128x128xbf16>
    %cst_18 = arith.constant dense<0.000000e+00> : vector<128x128xf32>
    %27 = tpu.matmul %11, %26, %cst_18 {dimension_numbers = #tpu.dot_dimension_numbers<[1], [0], [0], [1], [0, 0, 1, 1], [], []>} : vector<128x128xbf16>, vector<128x128xbf16>, vector<128x128xf32> -> vector<128x128xf32>
    %28 = vector.extract_strided_slice %0 {offsets = [2, 0], sizes = [1, 128], strides = [1, 1]} : vector<8x128xf32> to vector<1x128xf32>
    %29 = vector.broadcast %28 : vector<1x128xf32> to vector<128x128xf32>
    %30 = arith.addf %27, %29 : vector<128x128xf32>
    %cst_19 = arith.constant 0.000000e+00 : f32
    %31 = vector.broadcast %cst_19 : f32 to vector<128x128xf32>
    %32 = arith.maximumf %30, %31 : vector<128x128xf32>
    %33 = arith.truncf %32 : vector<128x128xf32> to vector<128x128xbf16>
    %c2 = arith.constant 2 : index
    %c0_20 = arith.constant 0 : index
    %c0_21 = arith.constant 0 : index
    %34 = vector.load %arg5[%c2, %c0_20, %c0_21] : memref<3x128x128xbf16, #tpu.memory_space<vmem>>, vector<1x128x128xbf16>
    %35 = vector.shape_cast %34 : vector<1x128x128xbf16> to vector<128x128xbf16>
    %cst_22 = arith.constant dense<0.000000e+00> : vector<128x128xf32>
    %36 = tpu.matmul %33, %35, %cst_22 {dimension_numbers = #tpu.dot_dimension_numbers<[1], [0], [0], [1], [0, 0, 1, 1], [], []>} : vector<128x128xbf16>, vector<128x128xbf16>, vector<128x128xf32> -> vector<128x128xf32>
    %37 = arith.truncf %36 : vector<128x128xf32> to vector<128x128xbf16>
    %cst_23 = arith.constant dense<0.000000e+00> : vector<128x128xf32>
    %38 = tpu.matmul %11, %37, %cst_23 {dimension_numbers = #tpu.dot_dimension_numbers<[1], [0], [0], [1], [0, 0, 1, 1], [], []>} : vector<128x128xbf16>, vector<128x128xbf16>, vector<128x128xf32> -> vector<128x128xf32>
    %39 = vector.extract_strided_slice %0 {offsets = [3, 0], sizes = [1, 128], strides = [1, 1]} : vector<8x128xf32> to vector<1x128xf32>
    %40 = vector.broadcast %39 : vector<1x128xf32> to vector<128x128xf32>
    %41 = arith.addf %38, %40 : vector<128x128xf32>
    %cst_24 = arith.constant 0.000000e+00 : f32
    %42 = vector.broadcast %cst_24 : f32 to vector<128x128xf32>
    %43 = arith.maximumf %41, %42 : vector<128x128xf32>
    %44 = arith.truncf %43 : vector<128x128xf32> to vector<128x128xbf16>
    %c0_25 = arith.constant 0 : index
    %c0_26 = arith.constant 0 : index
    %c0_27 = arith.constant 0 : index
    %45 = vector.load %arg3[%c0_25, %c0_26, %c0_27] : memref<1x16x128xbf16, #tpu.memory_space<vmem>>, vector<1x16x128xbf16>
    %46 = vector.shape_cast %45 : vector<1x16x128xbf16> to vector<16x128xbf16>
    %cst_28 = arith.constant dense<0.000000e+00> : vector<16x128xf32>
    %47 = tpu.matmul %46, %44, %cst_28 {dimension_numbers = #tpu.dot_dimension_numbers<[1], [0], [0], [1], [0, 0, 1, 1], [], []>} : vector<16x128xbf16>, vector<128x128xbf16>, vector<16x128xf32> -> vector<16x128xf32>
    %48 = vector.extract_strided_slice %0 {offsets = [4, 0], sizes = [1, 128], strides = [1, 1]} : vector<8x128xf32> to vector<1x128xf32>
    %49 = vector.broadcast %48 : vector<1x128xf32> to vector<16x128xf32>
    %50 = arith.mulf %47, %49 : vector<16x128xf32>
    %cst_29 = arith.constant dense<0.000000e+00> : vector<16xf32>
    %51 = vector.multi_reduction <add>, %50, %cst_29 [1] : vector<16x128xf32> to vector<16xf32>
    %52 = vector.shape_cast %51 : vector<16xf32> to vector<16x1xf32>
    %53 = vector.extract_strided_slice %0 {offsets = [5, 0], sizes = [1, 128], strides = [1, 1]} : vector<8x128xf32> to vector<1x128xf32>
    %54 = vector.broadcast %52 : vector<16x1xf32> to vector<16x128xf32>
    %55 = vector.broadcast %53 : vector<1x128xf32> to vector<16x128xf32>
    %56 = arith.addf %54, %55 : vector<16x128xf32>
    %c0_30 = arith.constant 0 : index
    %c0_31 = arith.constant 0 : index
    %57 = vector.load %arg7[%c0_30, %c0_31] : memref<16x128xf32, #tpu.memory_space<vmem>>, vector<16x128xf32>
    tpu.vector_store %arg7[%c0_30, %c0_31], %56 {strides = array<i32>} : memref<16x128xf32, #tpu.memory_space<vmem>>, vector<16x128xf32>,
    return
  }
  func.func @transform_0(%arg0: i32) -> (i32, i32) {
    %c0_i32 = arith.constant 0 : i32
    %c0_i32_0 = arith.constant 0 : i32
    return %arg0, %c0_i32 : i32, i32
  }
  func.func @transform_1(%arg0: i32) -> (i32, i32, i32) {
    %c0_i32 = arith.constant 0 : i32
    %c0_i32_0 = arith.constant 0 : i32
    %c0_i32_1 = arith.constant 0 : i32
    return %arg0, %c0_i32, %c0_i32_0 : i32, i32, i32
  }
  func.func @transform_2(%arg0: i32) -> (i32, i32, i32) {
    %c0_i32 = arith.constant 0 : i32
    %c0_i32_0 = arith.constant 0 : i32
    %c0_i32_1 = arith.constant 0 : i32
    return %arg0, %c0_i32, %c0_i32_0 : i32, i32, i32
  }
  func.func @transform_3(%arg0: i32) -> (i32, i32) {
    %c0_i32 = arith.constant 0 : i32
    %c0_i32_0 = arith.constant 0 : i32
    %c0_i32_1 = arith.constant 0 : i32
    return %c0_i32, %c0_i32_0 : i32, i32
  }
  func.func @transform_4(%arg0: i32) -> (i32, i32, i32) {
    %c0_i32 = arith.constant 0 : i32
    %c0_i32_0 = arith.constant 0 : i32
    %c0_i32_1 = arith.constant 0 : i32
    %c0_i32_2 = arith.constant 0 : i32
    return %c0_i32, %c0_i32_0, %c0_i32_1 : i32, i32, i32
  }
  func.func @transform_5(%arg0: i32) -> (i32, i32) {
    %c0_i32 = arith.constant 0 : i32
    %c0_i32_0 = arith.constant 0 : i32
    %c0_i32_1 = arith.constant 0 : i32
    return %c0_i32, %c0_i32_0 : i32, i32
  }
  func.func @transform_6(%arg0: i32) -> (i32, i32) {
    %c0_i32 = arith.constant 0 : i32
    %c0_i32_0 = arith.constant 0 : i32
    return %arg0, %c0_i32 : i32, i32
  }
}

</mosaic_0001>

<llo_original>
// kernel: tpu_custom_call.1
$region0: #{tpu_custom_call.1}
  #allocation0 [shape = 'u32[]', space=smem, size = 0x4, offset = 0x4, fixed_abs, tag = 'smem constant byte address 0x4 - core index']
  #allocation1 [shape = 'u32[144,128]{1,0:T(1,128)}', space=vmem, size = 0x12000, scoped, tag = 'internal scratch']
  %s0 = inlined_call_operand.vmem [shape: f32[256,8], index: 0, kind: input, shape index: {}]
  %s1 = inlined_call_operand.hbm [shape: bf16[2,128,128], index: 1, kind: input, shape index: {}]
  %s2 = inlined_call_operand.vmem [shape: bf16[2,16,128], index: 2, kind: input, shape index: {}]
  %s3 = inlined_call_operand.vmem [shape: f32[8,128], index: 3, kind: input, shape index: {}]
  %s4 = inlined_call_operand.vmem [shape: bf16[3,128,128], index: 4, kind: input, shape index: {}]
  %s5 = inlined_call_operand.vmem [shape: f32[8,128], index: 5, kind: input, shape index: {}]
  %s6 = inlined_call_operand.hbm [shape: f32[32,128], index: 6, kind: output, shape index: {}]
  %s7 = sld [smem:[#allocation0]]
  $region61: #{tpu_custom_call.1} parent=0
    _
  %s9 = ssub.s32 1, %s7
  %s10 = scalar_select 0, %s9, %s7
  $region1: #{tpu_custom_call.1} parent=0
    #allocation2 [shape = 'u8[65536]{0}', space=vmem, size = 0x10000, scoped, tag = 'input window, operand 1']
    #allocation3 [shape = 's32[2]{0}', space=sflag, size = 0x8, scoped, tag = 'scoped memory for tpu_custom_call.1']
    #allocation4 [shape = 's32[2]{0}', space=sflag, size = 0x8, scoped, tag = 'scoped memory for tpu_custom_call.1']
    #allocation5 [shape = 'u8[16384]{0}', space=vmem, size = 0x4000, scoped, tag = 'output window, operand 0']
    %11 = vsyncpa [#allocation3], 0
    %s12 = scalar_lea.sflag [#allocation3], 1
    %13 = vsyncpa %s12, 0
    %14 = vsyncpa [#allocation4], 0
    %s15 = scalar_lea.sflag [#allocation4], 1
    %16 = vsyncpa %s15, 0
    loop: start=0, step=1, limit=4
    $region2: #{tpu_custom_call.1} parent=1 // loop_pre_header
      _
    $region3: #{tpu_custom_call.1} parent=1 // loop_header
      %s18 = sphi 0, %s22
      %p19 = scmp.ge.s32.totalorder %s18, 4
      %s28 = sphi 0, %s30
      %s31 = sphi 0, %s28
      %s32 = sphi 0, %s31
      %s48 = sphi 0, %s32
      %s54 = sphi 0, %s56
      %s57 = sphi 0, %s54
      %s58 = sphi 0, %s57
      %s74 = sphi 0, %s58
      %s80 = sphi 0, %s82
      %s83 = sphi 0, %s80
      %s84 = sphi 0, %s83
      %s100 = sphi 0, %s84
      %s104 = sphi 0, %s104
      %s106 = sphi 0, %s104
      %s107 = sphi 0, %s106
      %s121 = sphi 0, %s107
      %s125 = sphi 0, %s125
      %s127 = sphi 0, %s125
      %s128 = sphi 0, %s127
      %s142 = sphi 0, %s128
      %s146 = sphi 0, %s146
      %s148 = sphi 0, %s146
      %s149 = sphi 0, %s148
      %s163 = sphi 0, %s149
      %s169 = sphi 0, %s171
      %s172 = sphi 0, %s169
      %s173 = sphi 0, %s172
      %s189 = sphi 0, %s173
    $region4: #{tpu_custom_call.1} parent=1 // loop_header_branch
      %21 = sbr.rel (%p19) target = $region8
    $region5: #{tpu_custom_call.1} parent=1 // loop_body
      %s23 = ssub.s32 %s18, 1
      %s24 = ssub.s32 %s18, 2
      %s25 = sadd.s32 %s18, 1
      %s26 = ssub.s32 %s18, %s25
      %p27 = scmp.eq.s32.totalorder %s26, 0
      %s29 = sadd.s32 %s28, 1
      %s30 = scalar_select %p27, %s28, %s29
      %p33 = pneg %p27
      %p34 = scmp.eq.s32.totalorder %s18, 1
      %p35 = por %p33, %p34
      %p36 = scmp.ne.s32.totalorder %s28, %s31
      %p37 = scmp.eq.s32.totalorder %s18, 0
      %p38 = por %p36, %p37
      %p39 = scmp.ne.s32.totalorder %s28, %s31
      %p40 = scmp.eq.s32.totalorder %s23, 1
      %p41 = por %p39, %p40
      %p42 = scmp.ne.s32.totalorder %s31, %s32
      %p43 = scmp.eq.s32.totalorder %s23, 0
      %p44 = por %p42, %p43
      %p45 = scmp.ne.s32.totalorder %s31, %s32
      %p46 = scmp.eq.s32.totalorder %s24, 1
      %p47 = por %p45, %p46
      %p49 = scmp.ne.s32.totalorder %s32, %s48
      %p50 = scmp.eq.s32.totalorder %s24, 0
      %p51 = por %p49, %p50
      %s52 = ssub.s32 %s18, %s25
      %p53 = scmp.eq.s32.totalorder %s52, 0
      %s55 = sadd.s32 %s54, 1
      %s56 = scalar_select %p53, %s54, %s55
      %p59 = pneg %p53
      %p60 = scmp.eq.s32.totalorder %s18, 1
      %p61 = por %p59, %p60
      %p62 = scmp.ne.s32.totalorder %s54, %s57
      %p63 = scmp.eq.s32.totalorder %s18, 0
      %p64 = por %p62, %p63
      %p65 = scmp.ne.s32.totalorder %s54, %s57
      %p66 = scmp.eq.s32.totalorder %s23, 1
      %p67 = por %p65, %p66
      %p68 = scmp.ne.s32.totalorder %s57, %s58
      %p69 = scmp.eq.s32.totalorder %s23, 0
      %p70 = por %p68, %p69
      %p71 = scmp.ne.s32.totalorder %s57, %s58
      %p72 = scmp.eq.s32.totalorder %s24, 1
      %p73 = por %p71, %p72
      %p75 = scmp.ne.s32.totalorder %s58, %s74
      %p76 = scmp.eq.s32.totalorder %s24, 0
      %p77 = por %p75, %p76
      %s78 = ssub.s32 %s18, %s25
      %p79 = scmp.eq.s32.totalorder %s78, 0
      %s81 = sadd.s32 %s80, 1
      %s82 = scalar_select %p79, %s80, %s81
      %p85 = pneg %p79
      %p86 = scmp.eq.s32.totalorder %s18, 1
      %p87 = por %p85, %p86
      %p88 = scmp.ne.s32.totalorder %s80, %s83
      %p89 = scmp.eq.s32.totalorder %s18, 0
      %p90 = por %p88, %p89
      %p91 = scmp.ne.s32.totalorder %s80, %s83
      %p92 = scmp.eq.s32.totalorder %s23, 1
      %p93 = por %p91, %p92
      %p94 = scmp.ne.s32.totalorder %s83, %s84
      %p95 = scmp.eq.s32.totalorder %s23, 0
      %p96 = por %p94, %p95
      %p97 = scmp.ne.s32.totalorder %s83, %s84
      %p98 = scmp.eq.s32.totalorder %s24, 1
      %p99 = por %p97, %p98
      %p101 = scmp.ne.s32.totalorder %s84, %s100
      %p102 = scmp.eq.s32.totalorder %s24, 0
      %p103 = por %p101, %p102
      %s105 = sadd.s32 %s104, 1
      %p108 = scmp.eq.s32.totalorder %s18, 1
      %p109 = scmp.ne.s32.totalorder %s104, %s106
      %p110 = scmp.eq.s32.totalorder %s18, 0
      %p111 = por %p109, %p110
      %p112 = scmp.ne.s32.totalorder %s104, %s106
      %p113 = scmp.eq.s32.totalorder %s23, 1
      %p114 = por %p112, %p113
      %p115 = scmp.ne.s32.totalorder %s106, %s107
      %p116 = scmp.eq.s32.totalorder %s23, 0
      %p117 = por %p115, %p116
      %p118 = scmp.ne.s32.totalorder %s106, %s107
      %p119 = scmp.eq.s32.totalorder %s24, 1
      %p120 = por %p118, %p119
      %p122 = scmp.ne.s32.totalorder %s107, %s121
      %p123 = scmp.eq.s32.totalorder %s24, 0
      %p124 = por %p122, %p123
      %s126 = sadd.s32 %s125, 1
      %p129 = scmp.eq.s32.totalorder %s18, 1
      %p130 = scmp.ne.s32.totalorder %s125, %s127
      %p131 = scmp.eq.s32.totalorder %s18, 0
      %p132 = por %p130, %p131
      %p133 = scmp.ne.s32.totalorder %s125, %s127
      %p134 = scmp.eq.s32.totalorder %s23, 1
      %p135 = por %p133, %p134
      %p136 = scmp.ne.s32.totalorder %s127, %s128
      %p137 = scmp.eq.s32.totalorder %s23, 0
      %p138 = por %p136, %p137
      %p139 = scmp.ne.s32.totalorder %s127, %s128
      %p140 = scmp.eq.s32.totalorder %s24, 1
      %p141 = por %p139, %p140
      %p143 = scmp.ne.s32.totalorder %s128, %s142
      %p144 = scmp.eq.s32.totalorder %s24, 0
      %p145 = por %p143, %p144
      %s147 = sadd.s32 %s146, 1
      %p150 = scmp.eq.s32.totalorder %s18, 1
      %p151 = scmp.ne.s32.totalorder %s146, %s148
      %p152 = scmp.eq.s32.totalorder %s18, 0
      %p153 = por %p151, %p152
      %p154 = scmp.ne.s32.totalorder %s146, %s148
      %p155 = scmp.eq.s32.totalorder %s23, 1
      %p156 = por %p154, %p155
      %p157 = scmp.ne.s32.totalorder %s148, %s149
      %p158 = scmp.eq.s32.totalorder %s23, 0
      %p159 = por %p157, %p158
      %p160 = scmp.ne.s32.totalorder %s148, %s149
      %p161 = scmp.eq.s32.totalorder %s24, 1
      %p162 = por %p160, %p161
      %p164 = scmp.ne.s32.totalorder %s149, %s163
      %p165 = scmp.eq.s32.totalorder %s24, 0
      %p166 = por %p164, %p165
      %s167 = ssub.s32 %s18, %s25
      %p168 = scmp.eq.s32.totalorder %s167, 0
      %s170 = sadd.s32 %s169, 1
      %s171 = scalar_select %p168, %s169, %s170
      %p174 = pneg %p168
      %p175 = scmp.eq.s32.totalorder %s18, 1
      %p176 = por %p174, %p175
      %p177 = scmp.ne.s32.totalorder %s169, %s172
      %p178 = scmp.eq.s32.totalorder %s18, 0
      %p179 = por %p177, %p178
      %p180 = scmp.ne.s32.totalorder %s169, %s172
      %p181 = scmp.eq.s32.totalorder %s23, 1
      %p182 = por %p180, %p181
      %p183 = scmp.ne.s32.totalorder %s172, %s173
      %p184 = scmp.eq.s32.totalorder %s23, 0
      %p185 = por %p183, %p184
      %p186 = scmp.ne.s32.totalorder %s172, %s173
      %p187 = scmp.eq.s32.totalorder %s24, 1
      %p188 = por %p186, %p187
      %p190 = scmp.ne.s32.totalorder %s173, %s189
      %p191 = scmp.eq.s32.totalorder %s24, 0
      %p192 = por %p190, %p191
      %p193 = scmp.le.s32.totalorder 1, %s18
      %p194 = scmp.lt.s32.totalorder %s18, 3
      %p195 = pnand %p193, %p194
      %p196 = pneg %p195
      // Predicated region
      $region9: #{tpu_custom_call.1} parent=5 // pred_check
        _
      $region10: #{tpu_custom_call.1} parent=5 // pred_check_branch
        %198 = sbr.rel (%p195) target = $region12
      $region11: #{tpu_custom_call.1} parent=5 // pred_region
        %s199 = ssub.s32 %s18, 1
        // Predicated region
        $region13: #{tpu_custom_call.1} parent=11 // pred_check
          %p200 = pneg %p117
        $region14: #{tpu_custom_call.1} parent=11 // pred_check_branch
          %202 = sbr.rel (%p200) target = $region16
        $region15: #{tpu_custom_call.1} parent=11 // pred_region
          _
        $region16: #{tpu_custom_call.1} parent=11 // pred_fallthru
          _
        // Predicated region
        $region17: #{tpu_custom_call.1} parent=11 // pred_check
          %p203 = pneg %p138
        $region18: #{tpu_custom_call.1} parent=11 // pred_check_branch
          %205 = sbr.rel (%p203) target = $region20
        $region19: #{tpu_custom_call.1} parent=11 // pred_region
          _
        $region20: #{tpu_custom_call.1} parent=11 // pred_fallthru
          _
        // Predicated region
        $region21: #{tpu_custom_call.1} parent=11 // pred_check
          %p206 = pneg %p159
        $region22: #{tpu_custom_call.1} parent=11 // pred_check_branch
          %208 = sbr.rel (%p206) target = $region24
        $region23: #{tpu_custom_call.1} parent=11 // pred_region
          _
        $region24: #{tpu_custom_call.1} parent=11 // pred_fallthru
          _
      $region12: #{tpu_custom_call.1} parent=5 // pred_fallthru
        _
      %p209 = scmp.lt.s32.totalorder %s18, 2
      // Predicated region
      $region25: #{tpu_custom_call.1} parent=5 // pred_check
        %p210 = pneg %p209
      $region26: #{tpu_custom_call.1} parent=5 // pred_check_branch
        %212 = sbr.rel (%p210) target = $region28
      $region27: #{tpu_custom_call.1} parent=5 // pred_region
        // Predicated region
        $region29: #{tpu_custom_call.1} parent=27 // pred_check
          %p213 = pneg %p38
        $region30: #{tpu_custom_call.1} parent=27 // pred_check_branch
          %215 = sbr.rel (%p213) target = $region32
        $region31: #{tpu_custom_call.1} parent=27 // pred_region
          %s216 = smul.u32 16, %s18
          %p217 = scmp.lt.s32.totalorder %s216, 31
          %s218 = scalar_select %p217, %s216, 31
          %s219 = smul.addr %s218, 8
          %s220 = scalar_lea.vmem %s0, %s219
          %s221 = smul.u32 16, %s18
        $region32: #{tpu_custom_call.1} parent=27 // pred_fallthru
          _
        // Predicated region
        $region33: #{tpu_custom_call.1} parent=27 // pred_check
          %p222 = pneg %p64
        $region34: #{tpu_custom_call.1} parent=27 // pred_check_branch
          %224 = sbr.rel (%p222) target = $region36
        $region35: #{tpu_custom_call.1} parent=27 // pred_region
          %s225 = sand.u32 %s54, 1
          %s226 = scalar_lea.sflag [#allocation3], %s225
          %s227 = sand.u32 %s54, 1
          %s228 = smul.addr %s227, 64
          %s229 = scalar_lea.vmem [#allocation2], %s228
          %s231 = ssub.s32 1024, 1024
          %232 = vsyncadd %s226, %s231
          %s233 = smul.addr %s18, 16
          %s234 = smul.addr %s233, 64
          %s235 = scalar_lea.hbm %s1, %s234
          %s236 = sshll.u32 %s229, 4
          %s237 = int_to_ptr.vmem [resolvable:$true] %s236
          %242 = dma.hbm_to_vmem [thread:$0]  %s235, 1024, %s237, %s226, 64, 64, 4
        $region36: #{tpu_custom_call.1} parent=27 // pred_fallthru
          _
        // Predicated region
        $region37: #{tpu_custom_call.1} parent=27 // pred_check
          %p243 = pneg %p90
        $region38: #{tpu_custom_call.1} parent=27 // pred_check_branch
          %245 = sbr.rel (%p243) target = $region40
        $region39: #{tpu_custom_call.1} parent=27 // pred_region
          %p246 = scmp.lt.s32.totalorder %s18, 1
          %s247 = scalar_select %p246, %s18, 1
          %s248 = smul.addr %s247, 2
          %s249 = smul.addr %s248, 4
          %s250 = scalar_lea.vmem %s2, %s249
        $region40: #{tpu_custom_call.1} parent=27 // pred_fallthru
          _
      $region28: #{tpu_custom_call.1} parent=5 // pred_fallthru
        _
      %p251 = scmp.le.s32.totalorder 1, %s18
      %p252 = scmp.lt.s32.totalorder %s18, 3
      %p253 = pnand %p251, %p252
      %p254 = pneg %p253
      // Predicated region
      $region41: #{tpu_custom_call.1} parent=5 // pred_check
        _
      $region42: #{tpu_custom_call.1} parent=5 // pred_check_branch
        %256 = sbr.rel (%p253) target = $region44
      $region43: #{tpu_custom_call.1} parent=5 // pred_region
        %s257 = ssub.s32 %s18, 1
        %s258 = sand.u32 %s57, 1
        %s259 = scalar_lea.sflag [#allocation3], %s258
        %s260 = sand.u32 %s57, 1
        %s261 = smul.addr %s260, 64
        %s262 = scalar_lea.vmem [#allocation2], %s261
        // Predicated region
        $region45: #{tpu_custom_call.1} parent=43 // pred_check
          %p263 = pneg %p70
        $region46: #{tpu_custom_call.1} parent=43 // pred_check_branch
          %265 = sbr.rel (%p263) target = $region48
        $region47: #{tpu_custom_call.1} parent=43 // pred_region
          %266 = dma.done %s259, 1024
        $region48: #{tpu_custom_call.1} parent=43 // pred_fallthru
          _
        %s267 = smul.u32 16, %s23
        %p268 = scmp.lt.s32.totalorder %s267, 31
        %s269 = scalar_select %p268, %s267, 31
        %s270 = smul.addr %s269, 8
        %s271 = scalar_lea.vmem %s0, %s270
        %p272 = pneg %p44
        %p273 = pneg %p41
        %s274 = sand.u32 %s57, 1
        %s275 = scalar_lea.sflag [#allocation3], %s274
        %s276 = sand.u32 %s57, 1
        %s277 = smul.addr %s276, 64
        %s278 = scalar_lea.vmem [#allocation2], %s277
        %p279 = pneg %p70
        %p280 = pneg %p67
        %p281 = scmp.lt.s32.totalorder %s23, 1
        %s282 = scalar_select %p281, %s23, 1
        %s283 = smul.addr %s282, 2
        %s284 = smul.addr %s283, 4
        %s285 = scalar_lea.vmem %s2, %s284
        %p286 = pneg %p96
        %p287 = pneg %p93
        %p288 = pneg %p117
        %p289 = pneg %p114
        %p290 = pneg %p138
        %p291 = pneg %p135
        %p292 = pneg %p159
        %p293 = pneg %p156
        %p294 = pneg %p185
        %p295 = pneg %p182
        %s296 = sand.u32 %s172, 1
        %s297 = scalar_lea.sflag [#allocation4], %s296
        %s298 = sand.u32 %s172, 1
        %s299 = smul.addr %s298, 16
        %s300 = scalar_lea.vmem [#allocation5], %s299
        %s301 = smul.u32 16, %s23
        %p302 = scmp.lt.s32.totalorder %s301, 31
        %s303 = scalar_select %p302, %s301, 31
        %s304 = smul.addr %s303, 8
        %s305 = scalar_lea.vmem %s0, %s304
        %s306 = smul.u32 16, %s23
        %p307 = scmp.lt.s32.totalorder %s23, 1
        %s308 = scalar_select %p307, %s23, 1
        %s309 = smul.addr %s308, 2
        %s310 = smul.addr %s309, 4
        %s311 = scalar_lea.vmem %s2, %s310
        %s312 = smul.u32 2, %s23
        %v314 = vld [vmem:[%s5] sm:$0xff]
        %v315 = vld [vmem:[%s305] sm:$0xff]
        %v316 = vld [vmem:[%s305 + $0x8] sm:$0xff]
        %v317 = vld [vmem:[%s305 + $0x10] sm:$0xff]
        %v318 = vld [vmem:[%s305 + $0x18] sm:$0xff]
        %v319 = vld [vmem:[%s305 + $0x20] sm:$0xff]
        %v320 = vld [vmem:[%s305 + $0x28] sm:$0xff]
        %v321 = vld [vmem:[%s305 + $0x30] sm:$0xff]
        %v322 = vld [vmem:[%s305 + $0x38] sm:$0xff]
        %v323 = vld [vmem:[%s305 + $0x40] sm:$0xff]
        %v324 = vld [vmem:[%s305 + $0x48] sm:$0xff]
        %v325 = vld [vmem:[%s305 + $0x50] sm:$0xff]
        %v326 = vld [vmem:[%s305 + $0x58] sm:$0xff]
        %v327 = vld [vmem:[%s305 + $0x60] sm:$0xff]
        %v328 = vld [vmem:[%s305 + $0x68] sm:$0xff]
        %v329 = vld [vmem:[%s305 + $0x70] sm:$0xff]
        %v330 = vld [vmem:[%s305 + $0x78] sm:$0xff]
        %v331 = vld [vmem:[%s3] sm:$0xff]
        %v332 = vlaneseq
        %v333 = vshrl.u32 %v332, 7
        %v334 = vsub.s32 0, %v333
        %v335 = vrot.slane %v314, %v334
        %vm336 = vcmask 64512
        %v338 = vsel %vm336, %v315, 0
        %v341 = vsel %vm336, %v316, 0
        %v344 = vsel %vm336, %v317, 0
        %v347 = vsel %vm336, %v318, 0
        %v350 = vsel %vm336, %v319, 0
        %v353 = vsel %vm336, %v320, 0
        %v356 = vsel %vm336, %v321, 0
        %v359 = vsel %vm336, %v322, 0
        %v362 = vsel %vm336, %v323, 0
        %v365 = vsel %vm336, %v324, 0
        %v368 = vsel %vm336, %v325, 0
        %v371 = vsel %vm336, %v326, 0
        %v374 = vsel %vm336, %v327, 0
        %v377 = vsel %vm336, %v328, 0
        %v380 = vsel %vm336, %v329, 0
        %v383 = vsel %vm336, %v330, 0
        %385 = vmatprep.subr.mxu0 0.0
        %386 = vmatpush1.msra.mxu0 0.0
        %387 = vmatprep.subr.mxu0 0.0
        %388 = vmatpush1.msra.mxu0 0.0
        %389 = vmatprep.subr.mxu0 0.0
        %390 = vmatpush1.msra.mxu0 0.0
        %391 = vmatprep.subr.mxu0 0.0
        %392 = vmatpush1.msra.mxu0 0.0
        %393 = vmatprep.subr.mxu0 0.0
        %394 = vmatpush1.msra.mxu0 0.0
        %395 = vmatprep.subr.mxu0 0.0
        %396 = vmatpush1.msra.mxu0 0.0
        %397 = vmatprep.subr.mxu0 0.0
        %398 = vmatpush1.msra.mxu0 0.0
        %399 = vmatprep.subr.mxu0 0.0
        %400 = vmatpush1.msra.mxu0 0.0
        %401 = vmatprep.subr.mxu0 0.0
        %402 = vmatpush1.msra.mxu0 0.0
        %403 = vmatprep.subr.mxu0 0.0
        %404 = vmatpush1.msra.mxu0 0.0
        %405 = vmatprep.subr.mxu0 0.0
        %406 = vmatpush1.msra.mxu0 0.0
        %407 = vmatprep.subr.mxu0 0.0
        %408 = vmatpush1.msra.mxu0 0.0
        %409 = vmatprep.subr.mxu0 0.0
        %410 = vmatpush1.msra.mxu0 0.0
        %411 = vmatprep.subr.mxu0 0.0
        %412 = vmatpush1.msra.mxu0 0.0
        %413 = vmatprep.subr.mxu0 0.0
        %414 = vmatpush1.msra.mxu0 0.0
        %415 = vmatprep.subr.mxu0 0.0
        %416 = vmatpush1.msra.mxu0 %v331
        %417 = vmatprep.subr.mxu0 0.0
        %418 = vmatpush2.msra.mxu0 0.0
        %419 = vmatprep.subr.mxu0 0.0
        %420 = vmatpush2.msra.mxu0 0.0
        %421 = vmatprep.subr.mxu0 0.0
        %422 = vmatpush2.msra.mxu0 0.0
        %423 = vmatprep.subr.mxu0 0.0
        %424 = vmatpush2.msra.mxu0 0.0
        %425 = vmatprep.subr.mxu0 0.0
        %426 = vmatpush2.msra.mxu0 0.0
        %427 = vmatprep.subr.mxu0 0.0
        %428 = vmatpush2.msra.mxu0 0.0
        %429 = vmatprep.subr.mxu0 0.0
        %430 = vmatpush2.msra.mxu0 0.0
        %431 = vmatprep.subr.mxu0 0.0
        %432 = vmatpush2.msra.mxu0 0.0
        %433 = vmatprep.subr.mxu0 0.0
        %434 = vmatpush2.msra.mxu0 0.0
        %435 = vmatprep.subr.mxu0 0.0
        %436 = vmatpush2.msra.mxu0 0.0
        %437 = vmatprep.subr.mxu0 0.0
        %438 = vmatpush2.msra.mxu0 0.0
        %439 = vmatprep.subr.mxu0 0.0
        %440 = vmatpush2.msra.mxu0 0.0
        %441 = vmatprep.subr.mxu0 0.0
        %442 = vmatpush2.msra.mxu0 0.0
        %443 = vmatprep.subr.mxu0 0.0
        %444 = vmatpush2.msra.mxu0 0.0
        %445 = vmatprep.subr.mxu0 0.0
        %446 = vmatpush2.msra.mxu0 0.0
        %447 = vmatprep.subr.mxu0 0.0
        %448 = vmatpush2.msra.mxu0 0.0
        %449 = vmatprep.mubr.f32.mxu0 0.0
        %450 = vmatmul.mubr.f32.gmra.mxu0 %v338
        %v451 = vpop.f32.mrf.mxu0
        %v452 = vadd.f32 %v335, %v451
        %v453 = vpop.f32.mrf.mxu0
        %454 = vmatprep.mubr.f32.mxu0 0.0
        %455 = vmatmul.mubr.f32.gmra.mxu0 %v341
        %v456 = vpop.f32.mrf.mxu0
        %v457 = vadd.f32 %v335, %v456
        %v458 = vpop.f32.mrf.mxu0
        %459 = vmatprep.mubr.f32.mxu0 0.0
        %460 = vmatmul.mubr.f32.gmra.mxu0 %v344
        %v461 = vpop.f32.mrf.mxu0
        %v462 = vadd.f32 %v335, %v461
        %v463 = vpop.f32.mrf.mxu0
        %464 = vmatprep.mubr.f32.mxu0 0.0
        %465 = vmatmul.mubr.f32.gmra.mxu0 %v347
        %v466 = vpop.f32.mrf.mxu0
        %v467 = vadd.f32 %v335, %v466
        %v468 = vpop.f32.mrf.mxu0
        %469 = vmatprep.mubr.f32.mxu0 0.0
        %470 = vmatmul.mubr.f32.gmra.mxu0 %v350
        %v471 = vpop.f32.mrf.mxu0
        %v472 = vadd.f32 %v335, %v471
        %v473 = vpop.f32.mrf.mxu0
        %474 = vmatprep.mubr.f32.mxu0 0.0
        %475 = vmatmul.mubr.f32.gmra.mxu0 %v353
        %v476 = vpop.f32.mrf.mxu0
        %v477 = vadd.f32 %v335, %v476
        %v478 = vpop.f32.mrf.mxu0
        %479 = vmatprep.mubr.f32.mxu0 0.0
        %480 = vmatmul.mubr.f32.gmra.mxu0 %v356
        %v481 = vpop.f32.mrf.mxu0
        %v482 = vadd.f32 %v335, %v481
        %v483 = vpop.f32.mrf.mxu0
        %484 = vmatprep.mubr.f32.mxu0 0.0
        %485 = vmatmul.mubr.f32.gmra.mxu0 %v359
        %v486 = vpop.f32.mrf.mxu0
        %v487 = vadd.f32 %v335, %v486
        %v488 = vpop.f32.mrf.mxu0
        %489 = vmatprep.mubr.f32.mxu0 0.0
        %490 = vmatmul.mubr.f32.gmra.mxu0 %v362
        %v491 = vpop.f32.mrf.mxu0
        %v492 = vadd.f32 %v335, %v491
        %v493 = vpop.f32.mrf.mxu0
        %494 = vmatprep.mubr.f32.mxu0 0.0
        %495 = vmatmul.mubr.f32.gmra.mxu0 %v365
        %v496 = vpop.f32.mrf.mxu0
        %v497 = vadd.f32 %v335, %v496
        %v498 = vpop.f32.mrf.mxu0
        %499 = vmatprep.mubr.f32.mxu0 0.0
        %500 = vmatmul.mubr.f32.gmra.mxu0 %v368
        %v501 = vpop.f32.mrf.mxu0
        %v502 = vadd.f32 %v335, %v501
        %v503 = vpop.f32.mrf.mxu0
        %504 = vmatprep.mubr.f32.mxu0 0.0
        %505 = vmatmul.mubr.f32.gmra.mxu0 %v371
        %v506 = vpop.f32.mrf.mxu0
        %v507 = vadd.f32 %v335, %v506
        %v508 = vpop.f32.mrf.mxu0
        %509 = vmatprep.mubr.f32.mxu0 0.0
        %510 = vmatmul.mubr.f32.gmra.mxu0 %v374
        %v511 = vpop.f32.mrf.mxu0
        %v512 = vadd.f32 %v335, %v511
        %v513 = vpop.f32.mrf.mxu0
        %514 = vmatprep.mubr.f32.mxu0 0.0
        %515 = vmatmul.mubr.f32.gmra.mxu0 %v377
        %v516 = vpop.f32.mrf.mxu0
        %v517 = vadd.f32 %v335, %v516
        %v518 = vpop.f32.mrf.mxu0
        %519 = vmatprep.mubr.f32.mxu0 0.0
        %520 = vmatmul.mubr.f32.gmra.mxu0 %v380
        %v521 = vpop.f32.mrf.mxu0
        %v522 = vadd.f32 %v335, %v521
        %v523 = vpop.f32.mrf.mxu0
        %524 = vmatprep.mubr.f32.mxu0 0.0
        %525 = vmatmul.mubr.f32.gmra.mxu0 %v383
        %v526 = vpop.f32.mrf.mxu0
        %v527 = vadd.f32 %v335, %v526
        %v528 = vpop.f32.mrf.mxu0
        %529 = vdwg.mxu0
        %v530 = vmax.f32 %v452, 0.0
        %v531 = vmax.f32 %v457, 0.0
        %v532 = vmax.f32 %v462, 0.0
        %v533 = vmax.f32 %v467, 0.0
        %v534 = vmax.f32 %v472, 0.0
        %v535 = vmax.f32 %v477, 0.0
        %v536 = vmax.f32 %v482, 0.0
        %v537 = vmax.f32 %v487, 0.0
        %v538 = vmax.f32 %v492, 0.0
        %v539 = vmax.f32 %v497, 0.0
        %v540 = vmax.f32 %v502, 0.0
        %v541 = vmax.f32 %v507, 0.0
        %v542 = vmax.f32 %v512, 0.0
        %v543 = vmax.f32 %v517, 0.0
        %v544 = vmax.f32 %v522, 0.0
        %v545 = vmax.f32 %v527, 0.0
        %v546 = vpack.c.bf16 %v531, %v530
        %v547 = vpack.c.bf16 %v533, %v532
        %v548 = vpack.c.bf16 %v535, %v534
        %v549 = vpack.c.bf16 %v537, %v536
        %v550 = vpack.c.bf16 %v539, %v538
        %v551 = vpack.c.bf16 %v541, %v540
        %v552 = vpack.c.bf16 %v543, %v542
        %v553 = vpack.c.bf16 %v545, %v544
        %v554 = vld [vmem:[%s262] sm:$0xf]
        %v555 = vld [vmem:[%s262 + $0x4] sm:$0xf]
        %v556 = vld [vmem:[%s262 + $0x8] sm:$0xf]
        %v557 = vld [vmem:[%s262 + $0xc] sm:$0xf]
        %v558 = vld [vmem:[%s262 + $0x10] sm:$0xf]
        %v559 = vld [vmem:[%s262 + $0x14] sm:$0xf]
        %v560 = vld [vmem:[%s262 + $0x18] sm:$0xf]
        %v561 = vld [vmem:[%s262 + $0x1c] sm:$0xf]
        %v562 = vld [vmem:[%s262 + $0x20] sm:$0xf]
        %v563 = vld [vmem:[%s262 + $0x24] sm:$0xf]
        %v564 = vld [vmem:[%s262 + $0x28] sm:$0xf]
        %v565 = vld [vmem:[%s262 + $0x2c] sm:$0xf]
        %v566 = vld [vmem:[%s262 + $0x30] sm:$0xf]
        %v567 = vld [vmem:[%s262 + $0x34] sm:$0xf]
        %v568 = vld [vmem:[%s262 + $0x38] sm:$0xf]
        %v569 = vld [vmem:[%s262 + $0x3c] sm:$0xf]
        %v570 = vld [vmem:[%s4] sm:$0xf]
        %v571 = vld [vmem:[%s4 + $0x4] sm:$0xf]
        %v572 = vld [vmem:[%s4 + $0x8] sm:$0xf]
        %v573 = vld [vmem:[%s4 + $0xc] sm:$0xf]
        %v574 = vld [vmem:[%s4 + $0x10] sm:$0xf]
        %v575 = vld [vmem:[%s4 + $0x14] sm:$0xf]
        %v576 = vld [vmem:[%s4 + $0x18] sm:$0xf]
        %v577 = vld [vmem:[%s4 + $0x1c] sm:$0xf]
        %v578 = vld [vmem:[%s4 + $0x20] sm:$0xf]
        %v579 = vld [vmem:[%s4 + $0x24] sm:$0xf]
        %v580 = vld [vmem:[%s4 + $0x28] sm:$0xf]
        %v581 = vld [vmem:[%s4 + $0x2c] sm:$0xf]
        %v582 = vld [vmem:[%s4 + $0x30] sm:$0xf]
        %v583 = vld [vmem:[%s4 + $0x34] sm:$0xf]
        %v584 = vld [vmem:[%s4 + $0x38] sm:$0xf]
        %v585 = vld [vmem:[%s4 + $0x3c] sm:$0xf]
        %v602 = vunpack.c.l.b16 %v570
        %v603 = vunpack.c.l.b16 %v571
        %v604 = vunpack.c.l.b16 %v572
        %v605 = vunpack.c.l.b16 %v573
        %v606 = vunpack.c.l.b16 %v574
        %v607 = vunpack.c.l.b16 %v575
        %v608 = vunpack.c.l.b16 %v576
        %v609 = vunpack.c.l.b16 %v577
        %v610 = vunpack.c.l.b16 %v578
        %v611 = vunpack.c.l.b16 %v579
        %v612 = vunpack.c.l.b16 %v580
        %v613 = vunpack.c.l.b16 %v581
        %v614 = vunpack.c.l.b16 %v582
        %v615 = vunpack.c.l.b16 %v583
        %v616 = vunpack.c.l.b16 %v584
        %v617 = vunpack.c.l.b16 %v585
        %v618 = vpack.c.b16 %v603, %v602
        %v619 = vpack.c.b16 %v605, %v604
        %v620 = vpack.c.b16 %v607, %v606
        %v621 = vpack.c.b16 %v609, %v608
        %v622 = vpack.c.b16 %v611, %v610
        %v623 = vpack.c.b16 %v613, %v612
        %v624 = vpack.c.b16 %v615, %v614
        %v625 = vpack.c.b16 %v617, %v616
        %634 = vmatprep.subr.bf16.mxu0 0
        %635 = vmatpush1.bf16.msra.mxu0 %v625
        %636 = vmatprep.subr.bf16.mxu0 0
        %637 = vmatpush1.bf16.msra.mxu0 %v624
        %638 = vmatprep.subr.bf16.mxu0 0
        %639 = vmatpush1.bf16.msra.mxu0 %v623
        %640 = vmatprep.subr.bf16.mxu0 0
        %641 = vmatpush1.bf16.msra.mxu0 %v622
        %642 = vmatprep.subr.bf16.mxu0 0
        %643 = vmatpush1.bf16.msra.mxu0 %v621
        %644 = vmatprep.subr.bf16.mxu0 0
        %645 = vmatpush1.bf16.msra.mxu0 %v620
        %646 = vmatprep.subr.bf16.mxu0 0
        %647 = vmatpush1.bf16.msra.mxu0 %v619
        %648 = vmatprep.subr.bf16.mxu0 0
        %649 = vmatpush1.bf16.msra.mxu0 %v618
        %650 = vmatprep.subr.bf16.mxu0 0
        %651 = vmatpush2.bf16.msra.mxu0 0
        %652 = vmatprep.subr.bf16.mxu0 0
        %653 = vmatpush2.bf16.msra.mxu0 0
        %654 = vmatprep.subr.bf16.mxu0 0
        %655 = vmatpush2.bf16.msra.mxu0 0
        %656 = vmatprep.subr.bf16.mxu0 0
        %657 = vmatpush2.bf16.msra.mxu0 0
        %658 = vmatprep.subr.bf16.mxu0 0
        %659 = vmatpush2.bf16.msra.mxu0 0
        %660 = vmatprep.subr.bf16.mxu0 0
        %661 = vmatpush2.bf16.msra.mxu0 0
        %662 = vmatprep.subr.bf16.mxu0 0
        %663 = vmatpush2.bf16.msra.mxu0 0
        %664 = vmatprep.subr.bf16.mxu0 0
        %665 = vmatpush2.bf16.msra.mxu0 0
        %666 = vmatprep.mubr.bf16.mxu0 0
        %667 = vmatmul.mubr.bf16.gmra.mxu0 %v546
        %v668 = vpop.f32.mrf.mxu0
        %v669 = vadd.f32 0.0, %v668
        %v670 = vpop.f32.mrf.mxu0
        %v671 = vpop.f32.mrf.mxu0
        %v672 = vadd.f32 0.0, %v671
        %v673 = vpop.f32.mrf.mxu0
        %674 = vmatprep.mubr.bf16.mxu0 0
        %675 = vmatmul.mubr.bf16.gmra.mxu0 %v547
        %v676 = vpop.f32.mrf.mxu0
        %v677 = vadd.f32 0.0, %v676
        %v678 = vpop.f32.mrf.mxu0
        %v679 = vpop.f32.mrf.mxu0
        %v680 = vadd.f32 0.0, %v679
        %v681 = vpop.f32.mrf.mxu0
        %682 = vmatprep.mubr.bf16.mxu0 0
        %683 = vmatmul.mubr.bf16.gmra.mxu0 %v548
        %v684 = vpop.f32.mrf.mxu0
        %v685 = vadd.f32 0.0, %v684
        %v686 = vpop.f32.mrf.mxu0
        %v687 = vpop.f32.mrf.mxu0
        %v688 = vadd.f32 0.0, %v687
        %v689 = vpop.f32.mrf.mxu0
        %690 = vmatprep.mubr.bf16.mxu0 0
        %691 = vmatmul.mubr.bf16.gmra.mxu0 %v549
        %v692 = vpop.f32.mrf.mxu0
        %v693 = vadd.f32 0.0, %v692
        %v694 = vpop.f32.mrf.mxu0
        %v695 = vpop.f32.mrf.mxu0
        %v696 = vadd.f32 0.0, %v695
        %v697 = vpop.f32.mrf.mxu0
        %698 = vmatprep.mubr.bf16.mxu0 0
        %699 = vmatmul.mubr.bf16.gmra.mxu0 %v550
        %v700 = vpop.f32.mrf.mxu0
        %v701 = vadd.f32 0.0, %v700
        %v702 = vpop.f32.mrf.mxu0
        %v703 = vpop.f32.mrf.mxu0
        %v704 = vadd.f32 0.0, %v703
        %v705 = vpop.f32.mrf.mxu0
        %706 = vmatprep.mubr.bf16.mxu0 0
        %707 = vmatmul.mubr.bf16.gmra.mxu0 %v551
        %v708 = vpop.f32.mrf.mxu0
        %v709 = vadd.f32 0.0, %v708
        %v710 = vpop.f32.mrf.mxu0
        %v711 = vpop.f32.mrf.mxu0
        %v712 = vadd.f32 0.0, %v711
        %v713 = vpop.f32.mrf.mxu0
        %714 = vmatprep.mubr.bf16.mxu0 0
        %715 = vmatmul.mubr.bf16.gmra.mxu0 %v552
        %v716 = vpop.f32.mrf.mxu0
        %v717 = vadd.f32 0.0, %v716
        %v718 = vpop.f32.mrf.mxu0
        %v719 = vpop.f32.mrf.mxu0
        %v720 = vadd.f32 0.0, %v719
        %v721 = vpop.f32.mrf.mxu0
        %722 = vmatprep.mubr.bf16.mxu0 0
        %723 = vmatmul.mubr.bf16.gmra.mxu0 %v553
        %v724 = vpop.f32.mrf.mxu0
        %v725 = vadd.f32 0.0, %v724
        %v726 = vpop.f32.mrf.mxu0
        %v727 = vpop.f32.mrf.mxu0
        %v728 = vadd.f32 0.0, %v727
        %v729 = vpop.f32.mrf.mxu0
        %730 = vdwg.mxu0
        %v731 = vpack.c.bf16 %v672, %v669
        %v732 = vpack.c.bf16 %v680, %v677
        %v733 = vpack.c.bf16 %v688, %v685
        %v734 = vpack.c.bf16 %v696, %v693
        %v735 = vpack.c.bf16 %v704, %v701
        %v736 = vpack.c.bf16 %v712, %v709
        %v737 = vpack.c.bf16 %v720, %v717
        %v738 = vpack.c.bf16 %v728, %v725
        %v739 = vlaneseq
        %v740 = vshrl.u32 %v739, 7
        %v741 = vsub.s32 1, %v740
        %v742 = vrot.slane %v314, %v741
        %v759 = vunpack.c.l.b16 %v554
        %v760 = vunpack.c.l.b16 %v555
        %v761 = vunpack.c.l.b16 %v556
        %v762 = vunpack.c.l.b16 %v557
        %v763 = vunpack.c.l.b16 %v558
        %v764 = vunpack.c.l.b16 %v559
        %v765 = vunpack.c.l.b16 %v560
        %v766 = vunpack.c.l.b16 %v561
        %v767 = vunpack.c.l.b16 %v562
        %v768 = vunpack.c.l.b16 %v563
        %v769 = vunpack.c.l.b16 %v564
        %v770 = vunpack.c.l.b16 %v565
        %v771 = vunpack.c.l.b16 %v566
        %v772 = vunpack.c.l.b16 %v567
        %v773 = vunpack.c.l.b16 %v568
        %v774 = vunpack.c.l.b16 %v569
        %v775 = vpack.c.b16 %v760, %v759
        %v776 = vpack.c.b16 %v762, %v761
        %v777 = vpack.c.b16 %v764, %v763
        %v778 = vpack.c.b16 %v766, %v765
        %v779 = vpack.c.b16 %v768, %v767
        %v780 = vpack.c.b16 %v770, %v769
        %v781 = vpack.c.b16 %v772, %v771
        %v782 = vpack.c.b16 %v774, %v773
        %791 = vmatprep.subr.bf16.mxu0 0
        %792 = vmatpush1.bf16.msra.mxu0 %v738
        %793 = vmatprep.subr.bf16.mxu0 0
        %794 = vmatpush1.bf16.msra.mxu0 %v737
        %795 = vmatprep.subr.bf16.mxu0 0
        %796 = vmatpush1.bf16.msra.mxu0 %v736
        %797 = vmatprep.subr.bf16.mxu0 0
        %798 = vmatpush1.bf16.msra.mxu0 %v735
        %799 = vmatprep.subr.bf16.mxu0 0
        %800 = vmatpush1.bf16.msra.mxu0 %v734
        %801 = vmatprep.subr.bf16.mxu0 0
        %802 = vmatpush1.bf16.msra.mxu0 %v733
        %803 = vmatprep.subr.bf16.mxu0 0
        %804 = vmatpush1.bf16.msra.mxu0 %v732
        %805 = vmatprep.subr.bf16.mxu0 0
        %806 = vmatpush1.bf16.msra.mxu0 %v731
        %807 = vmatprep.subr.bf16.mxu0 0
        %808 = vmatpush2.bf16.msra.mxu0 0
        %809 = vmatprep.subr.bf16.mxu0 0
        %810 = vmatpush2.bf16.msra.mxu0 0
        %811 = vmatprep.subr.bf16.mxu0 0
        %812 = vmatpush2.bf16.msra.mxu0 0
        %813 = vmatprep.subr.bf16.mxu0 0
        %814 = vmatpush2.bf16.msra.mxu0 0
        %815 = vmatprep.subr.bf16.mxu0 0
        %816 = vmatpush2.bf16.msra.mxu0 0
        %817 = vmatprep.subr.bf16.mxu0 0
        %818 = vmatpush2.bf16.msra.mxu0 0
        %819 = vmatprep.subr.bf16.mxu0 0
        %820 = vmatpush2.bf16.msra.mxu0 0
        %821 = vmatprep.subr.bf16.mxu0 0
        %822 = vmatpush2.bf16.msra.mxu0 0
        %823 = vmatprep.mubr.bf16.mxu0 0
        %824 = vmatmul.mubr.bf16.gmra.mxu0 %v775
        %v825 = vpop.f32.mrf.mxu0
        %v826 = vadd.f32 %v742, %v825
        %v827 = vpop.f32.mrf.mxu0
        %v828 = vpop.f32.mrf.mxu0
        %v829 = vadd.f32 %v742, %v828
        %v830 = vpop.f32.mrf.mxu0
        %831 = vmatprep.mubr.bf16.mxu0 0
        %832 = vmatmul.mubr.bf16.gmra.mxu0 %v776
        %v833 = vpop.f32.mrf.mxu0
        %v834 = vadd.f32 %v742, %v833
        %v835 = vpop.f32.mrf.mxu0
        %v836 = vpop.f32.mrf.mxu0
        %v837 = vadd.f32 %v742, %v836
        %v838 = vpop.f32.mrf.mxu0
        %839 = vmatprep.mubr.bf16.mxu0 0
        %840 = vmatmul.mubr.bf16.gmra.mxu0 %v777
        %v841 = vpop.f32.mrf.mxu0
        %v842 = vadd.f32 %v742, %v841
        %v843 = vpop.f32.mrf.mxu0
        %v844 = vpop.f32.mrf.mxu0
        %v845 = vadd.f32 %v742, %v844
        %v846 = vpop.f32.mrf.mxu0
        %847 = vmatprep.mubr.bf16.mxu0 0
        %848 = vmatmul.mubr.bf16.gmra.mxu0 %v778
        %v849 = vpop.f32.mrf.mxu0
        %v850 = vadd.f32 %v742, %v849
        %v851 = vpop.f32.mrf.mxu0
        %v852 = vpop.f32.mrf.mxu0
        %v853 = vadd.f32 %v742, %v852
        %v854 = vpop.f32.mrf.mxu0
        %855 = vmatprep.mubr.bf16.mxu0 0
        %856 = vmatmul.mubr.bf16.gmra.mxu0 %v779
        %v857 = vpop.f32.mrf.mxu0
        %v858 = vadd.f32 %v742, %v857
        %v859 = vpop.f32.mrf.mxu0
        %v860 = vpop.f32.mrf.mxu0
        %v861 = vadd.f32 %v742, %v860
        %v862 = vpop.f32.mrf.mxu0
        %863 = vmatprep.mubr.bf16.mxu0 0
        %864 = vmatmul.mubr.bf16.gmra.mxu0 %v780
        %v865 = vpop.f32.mrf.mxu0
        %v866 = vadd.f32 %v742, %v865
        %v867 = vpop.f32.mrf.mxu0
        %v868 = vpop.f32.mrf.mxu0
        %v869 = vadd.f32 %v742, %v868
        %v870 = vpop.f32.mrf.mxu0
        %871 = vmatprep.mubr.bf16.mxu0 0
        %872 = vmatmul.mubr.bf16.gmra.mxu0 %v781
        %v873 = vpop.f32.mrf.mxu0
        %v874 = vadd.f32 %v742, %v873
        %v875 = vpop.f32.mrf.mxu0
        %v876 = vpop.f32.mrf.mxu0
        %v877 = vadd.f32 %v742, %v876
        %v878 = vpop.f32.mrf.mxu0
        %879 = vmatprep.mubr.bf16.mxu0 0
        %880 = vmatmul.mubr.bf16.gmra.mxu0 %v782
        %v881 = vpop.f32.mrf.mxu0
        %v882 = vadd.f32 %v742, %v881
        %v883 = vpop.f32.mrf.mxu0
        %v884 = vpop.f32.mrf.mxu0
        %v885 = vadd.f32 %v742, %v884
        %v886 = vpop.f32.mrf.mxu0
        %887 = vdwg.mxu0
        %v888 = vmax.f32 %v826, 0.0
        %v889 = vmax.f32 %v829, 0.0
        %v890 = vmax.f32 %v834, 0.0
        %v891 = vmax.f32 %v837, 0.0
        %v892 = vmax.f32 %v842, 0.0
        %v893 = vmax.f32 %v845, 0.0
        %v894 = vmax.f32 %v850, 0.0
        %v895 = vmax.f32 %v853, 0.0
        %v896 = vmax.f32 %v858, 0.0
        %v897 = vmax.f32 %v861, 0.0
        %v898 = vmax.f32 %v866, 0.0
        %v899 = vmax.f32 %v869, 0.0
        %v900 = vmax.f32 %v874, 0.0
        %v901 = vmax.f32 %v877, 0.0
        %v902 = vmax.f32 %v882, 0.0
        %v903 = vmax.f32 %v885, 0.0
        %v904 = vpack.c.bf16 %v889, %v888
        %v905 = vpack.c.bf16 %v891, %v890
        %v906 = vpack.c.bf16 %v893, %v892
        %v907 = vpack.c.bf16 %v895, %v894
        %v908 = vpack.c.bf16 %v897, %v896
        %v909 = vpack.c.bf16 %v899, %v898
        %v910 = vpack.c.bf16 %v901, %v900
        %v911 = vpack.c.bf16 %v903, %v902
        %s912 = scalar_lea.vmem %s4, 64
        %v913 = vld [vmem:[%s912] sm:$0xf]
        %v914 = vld [vmem:[%s912 + $0x4] sm:$0xf]
        %v915 = vld [vmem:[%s912 + $0x8] sm:$0xf]
        %v916 = vld [vmem:[%s912 + $0xc] sm:$0xf]
        %v917 = vld [vmem:[%s912 + $0x10] sm:$0xf]
        %v918 = vld [vmem:[%s912 + $0x14] sm:$0xf]
        %v919 = vld [vmem:[%s912 + $0x18] sm:$0xf]
        %v920 = vld [vmem:[%s912 + $0x1c] sm:$0xf]
        %v921 = vld [vmem:[%s912 + $0x20] sm:$0xf]
        %v922 = vld [vmem:[%s912 + $0x24] sm:$0xf]
        %v923 = vld [vmem:[%s912 + $0x28] sm:$0xf]
        %v924 = vld [vmem:[%s912 + $0x2c] sm:$0xf]
        %v925 = vld [vmem:[%s912 + $0x30] sm:$0xf]
        %v926 = vld [vmem:[%s912 + $0x34] sm:$0xf]
        %v927 = vld [vmem:[%s912 + $0x38] sm:$0xf]
        %v928 = vld [vmem:[%s912 + $0x3c] sm:$0xf]
        %v945 = vunpack.c.l.b16 %v913
        %v946 = vunpack.c.l.b16 %v914
        %v947 = vunpack.c.l.b16 %v915
        %v948 = vunpack.c.l.b16 %v916
        %v949 = vunpack.c.l.b16 %v917
        %v950 = vunpack.c.l.b16 %v918
        %v951 = vunpack.c.l.b16 %v919
        %v952 = vunpack.c.l.b16 %v920
        %v953 = vunpack.c.l.b16 %v921
        %v954 = vunpack.c.l.b16 %v922
        %v955 = vunpack.c.l.b16 %v923
        %v956 = vunpack.c.l.b16 %v924
        %v957 = vunpack.c.l.b16 %v925
        %v958 = vunpack.c.l.b16 %v926
        %v959 = vunpack.c.l.b16 %v927
        %v960 = vunpack.c.l.b16 %v928
        %v961 = vpack.c.b16 %v946, %v945
        %v962 = vpack.c.b16 %v948, %v947
        %v963 = vpack.c.b16 %v950, %v949
        %v964 = vpack.c.b16 %v952, %v951
        %v965 = vpack.c.b16 %v954, %v953
        %v966 = vpack.c.b16 %v956, %v955
        %v967 = vpack.c.b16 %v958, %v957
        %v968 = vpack.c.b16 %v960, %v959
        %977 = vmatprep.subr.bf16.mxu0 0
        %978 = vmatpush1.bf16.msra.mxu0 %v968
        %979 = vmatprep.subr.bf16.mxu0 0
        %980 = vmatpush1.bf16.msra.mxu0 %v967
        %981 = vmatprep.subr.bf16.mxu0 0
        %982 = vmatpush1.bf16.msra.mxu0 %v966
        %983 = vmatprep.subr.bf16.mxu0 0
        %984 = vmatpush1.bf16.msra.mxu0 %v965
        %985 = vmatprep.subr.bf16.mxu0 0
        %986 = vmatpush1.bf16.msra.mxu0 %v964
        %987 = vmatprep.subr.bf16.mxu0 0
        %988 = vmatpush1.bf16.msra.mxu0 %v963
        %989 = vmatprep.subr.bf16.mxu0 0
        %990 = vmatpush1.bf16.msra.mxu0 %v962
        %991 = vmatprep.subr.bf16.mxu0 0
        %992 = vmatpush1.bf16.msra.mxu0 %v961
        %993 = vmatprep.subr.bf16.mxu0 0
        %994 = vmatpush2.bf16.msra.mxu0 0
        %995 = vmatprep.subr.bf16.mxu0 0
        %996 = vmatpush2.bf16.msra.mxu0 0
        %997 = vmatprep.subr.bf16.mxu0 0
        %998 = vmatpush2.bf16.msra.mxu0 0
        %999 = vmatprep.subr.bf16.mxu0 0
        %1000 = vmatpush2.bf16.msra.mxu0 0
        %1001 = vmatprep.subr.bf16.mxu0 0
        %1002 = vmatpush2.bf16.msra.mxu0 0
        %1003 = vmatprep.subr.bf16.mxu0 0
        %1004 = vmatpush2.bf16.msra.mxu0 0
        %1005 = vmatprep.subr.bf16.mxu0 0
        %1006 = vmatpush2.bf16.msra.mxu0 0
        %1007 = vmatprep.subr.bf16.mxu0 0
        %1008 = vmatpush2.bf16.msra.mxu0 0
        %1009 = vmatprep.mubr.bf16.mxu0 0
        %1010 = vmatmul.mubr.bf16.gmra.mxu0 %v904
        %v1011 = vpop.f32.mrf.mxu0
        %v1012 = vadd.f32 0.0, %v1011
        %v1013 = vpop.f32.mrf.mxu0
        %v1014 = vpop.f32.mrf.mxu0
        %v1015 = vadd.f32 0.0, %v1014
        %v1016 = vpop.f32.mrf.mxu0
        %1017 = vmatprep.mubr.bf16.mxu0 0
        %1018 = vmatmul.mubr.bf16.gmra.mxu0 %v905
        %v1019 = vpop.f32.mrf.mxu0
        %v1020 = vadd.f32 0.0, %v1019
        %v1021 = vpop.f32.mrf.mxu0
        %v1022 = vpop.f32.mrf.mxu0
        %v1023 = vadd.f32 0.0, %v1022
        %v1024 = vpop.f32.mrf.mxu0
        %1025 = vmatprep.mubr.bf16.mxu0 0
        %1026 = vmatmul.mubr.bf16.gmra.mxu0 %v906
        %v1027 = vpop.f32.mrf.mxu0
        %v1028 = vadd.f32 0.0, %v1027
        %v1029 = vpop.f32.mrf.mxu0
        %v1030 = vpop.f32.mrf.mxu0
        %v1031 = vadd.f32 0.0, %v1030
        %v1032 = vpop.f32.mrf.mxu0
        %1033 = vmatprep.mubr.bf16.mxu0 0
        %1034 = vmatmul.mubr.bf16.gmra.mxu0 %v907
        %v1035 = vpop.f32.mrf.mxu0
        %v1036 = vadd.f32 0.0, %v1035
        %v1037 = vpop.f32.mrf.mxu0
        %v1038 = vpop.f32.mrf.mxu0
        %v1039 = vadd.f32 0.0, %v1038
        %v1040 = vpop.f32.mrf.mxu0
        %1041 = vmatprep.mubr.bf16.mxu0 0
        %1042 = vmatmul.mubr.bf16.gmra.mxu0 %v908
        %v1043 = vpop.f32.mrf.mxu0
        %v1044 = vadd.f32 0.0, %v1043
        %v1045 = vpop.f32.mrf.mxu0
        %v1046 = vpop.f32.mrf.mxu0
        %v1047 = vadd.f32 0.0, %v1046
        %v1048 = vpop.f32.mrf.mxu0
        %1049 = vmatprep.mubr.bf16.mxu0 0
        %1050 = vmatmul.mubr.bf16.gmra.mxu0 %v909
        %v1051 = vpop.f32.mrf.mxu0
        %v1052 = vadd.f32 0.0, %v1051
        %v1053 = vpop.f32.mrf.mxu0
        %v1054 = vpop.f32.mrf.mxu0
        %v1055 = vadd.f32 0.0, %v1054
        %v1056 = vpop.f32.mrf.mxu0
        %1057 = vmatprep.mubr.bf16.mxu0 0
        %1058 = vmatmul.mubr.bf16.gmra.mxu0 %v910
        %v1059 = vpop.f32.mrf.mxu0
        %v1060 = vadd.f32 0.0, %v1059
        %v1061 = vpop.f32.mrf.mxu0
        %v1062 = vpop.f32.mrf.mxu0
        %v1063 = vadd.f32 0.0, %v1062
        %v1064 = vpop.f32.mrf.mxu0
        %1065 = vmatprep.mubr.bf16.mxu0 0
        %1066 = vmatmul.mubr.bf16.gmra.mxu0 %v911
        %v1067 = vpop.f32.mrf.mxu0
        %v1068 = vadd.f32 0.0, %v1067
        %v1069 = vpop.f32.mrf.mxu0
        %v1070 = vpop.f32.mrf.mxu0
        %v1071 = vadd.f32 0.0, %v1070
        %v1072 = vpop.f32.mrf.mxu0
        %1073 = vdwg.mxu0
        %v1074 = vpack.c.bf16 %v1015, %v1012
        %v1075 = vpack.c.bf16 %v1023, %v1020
        %v1076 = vpack.c.bf16 %v1031, %v1028
        %v1077 = vpack.c.bf16 %v1039, %v1036
        %v1078 = vpack.c.bf16 %v1047, %v1044
        %v1079 = vpack.c.bf16 %v1055, %v1052
        %v1080 = vpack.c.bf16 %v1063, %v1060
        %v1081 = vpack.c.bf16 %v1071, %v1068
        %v1082 = vlaneseq
        %v1083 = vshrl.u32 %v1082, 7
        %v1084 = vsub.s32 2, %v1083
        %v1085 = vrot.slane %v314, %v1084
        %1086 = vmatprep.subr.bf16.mxu0 0
        %1087 = vmatpush1.bf16.msra.mxu0 %v1081
        %1088 = vmatprep.subr.bf16.mxu0 0
        %1089 = vmatpush1.bf16.msra.mxu0 %v1080
        %1090 = vmatprep.subr.bf16.mxu0 0
        %1091 = vmatpush1.bf16.msra.mxu0 %v1079
        %1092 = vmatprep.subr.bf16.mxu0 0
        %1093 = vmatpush1.bf16.msra.mxu0 %v1078
        %1094 = vmatprep.subr.bf16.mxu0 0
        %1095 = vmatpush1.bf16.msra.mxu0 %v1077
        %1096 = vmatprep.subr.bf16.mxu0 0
        %1097 = vmatpush1.bf16.msra.mxu0 %v1076
        %1098 = vmatprep.subr.bf16.mxu0 0
        %1099 = vmatpush1.bf16.msra.mxu0 %v1075
        %1100 = vmatprep.subr.bf16.mxu0 0
        %1101 = vmatpush1.bf16.msra.mxu0 %v1074
        %1102 = vmatprep.subr.bf16.mxu0 0
        %1103 = vmatpush2.bf16.msra.mxu0 0
        %1104 = vmatprep.subr.bf16.mxu0 0
        %1105 = vmatpush2.bf16.msra.mxu0 0
        %1106 = vmatprep.subr.bf16.mxu0 0
        %1107 = vmatpush2.bf16.msra.mxu0 0
        %1108 = vmatprep.subr.bf16.mxu0 0
        %1109 = vmatpush2.bf16.msra.mxu0 0
        %1110 = vmatprep.subr.bf16.mxu0 0
        %1111 = vmatpush2.bf16.msra.mxu0 0
        %1112 = vmatprep.subr.bf16.mxu0 0
        %1113 = vmatpush2.bf16.msra.mxu0 0
        %1114 = vmatprep.subr.bf16.mxu0 0
        %1115 = vmatpush2.bf16.msra.mxu0 0
        %1116 = vmatprep.subr.bf16.mxu0 0
        %1117 = vmatpush2.bf16.msra.mxu0 0
        %1118 = vmatprep.mubr.bf16.mxu0 0
        %1119 = vmatmul.mubr.bf16.gmra.mxu0 %v775
        %v1120 = vpop.f32.mrf.mxu0
        %v1121 = vadd.f32 %v1085, %v1120
        %v1122 = vpop.f32.mrf.mxu0
        %v1123 = vpop.f32.mrf.mxu0
        %v1124 = vadd.f32 %v1085, %v1123
        %v1125 = vpop.f32.mrf.mxu0
        %1126 = vmatprep.mubr.bf16.mxu0 0
        %1127 = vmatmul.mubr.bf16.gmra.mxu0 %v776
        %v1128 = vpop.f32.mrf.mxu0
        %v1129 = vadd.f32 %v1085, %v1128
        %v1130 = vpop.f32.mrf.mxu0
        %v1131 = vpop.f32.mrf.mxu0
        %v1132 = vadd.f32 %v1085, %v1131
        %v1133 = vpop.f32.mrf.mxu0
        %1134 = vmatprep.mubr.bf16.mxu0 0
        %1135 = vmatmul.mubr.bf16.gmra.mxu0 %v777
        %v1136 = vpop.f32.mrf.mxu0
        %v1137 = vadd.f32 %v1085, %v1136
        %v1138 = vpop.f32.mrf.mxu0
        %v1139 = vpop.f32.mrf.mxu0
        %v1140 = vadd.f32 %v1085, %v1139
        %v1141 = vpop.f32.mrf.mxu0
        %1142 = vmatprep.mubr.bf16.mxu0 0
        %1143 = vmatmul.mubr.bf16.gmra.mxu0 %v778
        %v1144 = vpop.f32.mrf.mxu0
        %v1145 = vadd.f32 %v1085, %v1144
        %v1146 = vpop.f32.mrf.mxu0
        %v1147 = vpop.f32.mrf.mxu0
        %v1148 = vadd.f32 %v1085, %v1147
        %v1149 = vpop.f32.mrf.mxu0
        %1150 = vmatprep.mubr.bf16.mxu0 0
        %1151 = vmatmul.mubr.bf16.gmra.mxu0 %v779
        %v1152 = vpop.f32.mrf.mxu0
        %v1153 = vadd.f32 %v1085, %v1152
        %v1154 = vpop.f32.mrf.mxu0
        %v1155 = vpop.f32.mrf.mxu0
        %v1156 = vadd.f32 %v1085, %v1155
        %v1157 = vpop.f32.mrf.mxu0
        %1158 = vmatprep.mubr.bf16.mxu0 0
        %1159 = vmatmul.mubr.bf16.gmra.mxu0 %v780
        %v1160 = vpop.f32.mrf.mxu0
        %v1161 = vadd.f32 %v1085, %v1160
        %v1162 = vpop.f32.mrf.mxu0
        %v1163 = vpop.f32.mrf.mxu0
        %v1164 = vadd.f32 %v1085, %v1163
        %v1165 = vpop.f32.mrf.mxu0
        %1166 = vmatprep.mubr.bf16.mxu0 0
        %1167 = vmatmul.mubr.bf16.gmra.mxu0 %v781
        %v1168 = vpop.f32.mrf.mxu0
        %v1169 = vadd.f32 %v1085, %v1168
        %v1170 = vpop.f32.mrf.mxu0
        %v1171 = vpop.f32.mrf.mxu0
        %v1172 = vadd.f32 %v1085, %v1171
        %v1173 = vpop.f32.mrf.mxu0
        %1174 = vmatprep.mubr.bf16.mxu0 0
        %1175 = vmatmul.mubr.bf16.gmra.mxu0 %v782
        %v1176 = vpop.f32.mrf.mxu0
        %v1177 = vadd.f32 %v1085, %v1176
        %v1178 = vpop.f32.mrf.mxu0
        %v1179 = vpop.f32.mrf.mxu0
        %v1180 = vadd.f32 %v1085, %v1179
        %v1181 = vpop.f32.mrf.mxu0
        %1182 = vdwg.mxu0
        %v1183 = vmax.f32 %v1121, 0.0
        %v1184 = vmax.f32 %v1124, 0.0
        %v1185 = vmax.f32 %v1129, 0.0
        %v1186 = vmax.f32 %v1132, 0.0
        %v1187 = vmax.f32 %v1137, 0.0
        %v1188 = vmax.f32 %v1140, 0.0
        %v1189 = vmax.f32 %v1145, 0.0
        %v1190 = vmax.f32 %v1148, 0.0
        %v1191 = vmax.f32 %v1153, 0.0
        %v1192 = vmax.f32 %v1156, 0.0
        %v1193 = vmax.f32 %v1161, 0.0
        %v1194 = vmax.f32 %v1164, 0.0
        %v1195 = vmax.f32 %v1169, 0.0
        %v1196 = vmax.f32 %v1172, 0.0
        %v1197 = vmax.f32 %v1177, 0.0
        %v1198 = vmax.f32 %v1180, 0.0
        %v1199 = vpack.c.bf16 %v1184, %v1183
        %v1200 = vpack.c.bf16 %v1186, %v1185
        %v1201 = vpack.c.bf16 %v1188, %v1187
        %v1202 = vpack.c.bf16 %v1190, %v1189
        %v1203 = vpack.c.bf16 %v1192, %v1191
        %v1204 = vpack.c.bf16 %v1194, %v1193
        %v1205 = vpack.c.bf16 %v1196, %v1195
        %v1206 = vpack.c.bf16 %v1198, %v1197
        %s1207 = scalar_lea.vmem %s4, 128
        %v1208 = vld [vmem:[%s1207] sm:$0xf]
        %v1209 = vld [vmem:[%s1207 + $0x4] sm:$0xf]
        %v1210 = vld [vmem:[%s1207 + $0x8] sm:$0xf]
        %v1211 = vld [vmem:[%s1207 + $0xc] sm:$0xf]
        %v1212 = vld [vmem:[%s1207 + $0x10] sm:$0xf]
        %v1213 = vld [vmem:[%s1207 + $0x14] sm:$0xf]
        %v1214 = vld [vmem:[%s1207 + $0x18] sm:$0xf]
        %v1215 = vld [vmem:[%s1207 + $0x1c] sm:$0xf]
        %v1216 = vld [vmem:[%s1207 + $0x20] sm:$0xf]
        %v1217 = vld [vmem:[%s1207 + $0x24] sm:$0xf]
        %v1218 = vld [vmem:[%s1207 + $0x28] sm:$0xf]
        %v1219 = vld [vmem:[%s1207 + $0x2c] sm:$0xf]
        %v1220 = vld [vmem:[%s1207 + $0x30] sm:$0xf]
        %v1221 = vld [vmem:[%s1207 + $0x34] sm:$0xf]
        %v1222 = vld [vmem:[%s1207 + $0x38] sm:$0xf]
        %v1223 = vld [vmem:[%s1207 + $0x3c] sm:$0xf]
        %v1240 = vunpack.c.l.b16 %v1208
        %v1241 = vunpack.c.l.b16 %v1209
        %v1242 = vunpack.c.l.b16 %v1210
        %v1243 = vunpack.c.l.b16 %v1211
        %v1244 = vunpack.c.l.b16 %v1212
        %v1245 = vunpack.c.l.b16 %v1213
        %v1246 = vunpack.c.l.b16 %v1214
        %v1247 = vunpack.c.l.b16 %v1215
        %v1248 = vunpack.c.l.b16 %v1216
        %v1249 = vunpack.c.l.b16 %v1217
        %v1250 = vunpack.c.l.b16 %v1218
        %v1251 = vunpack.c.l.b16 %v1219
        %v1252 = vunpack.c.l.b16 %v1220
        %v1253 = vunpack.c.l.b16 %v1221
        %v1254 = vunpack.c.l.b16 %v1222
        %v1255 = vunpack.c.l.b16 %v1223
        %v1256 = vpack.c.b16 %v1241, %v1240
        %v1257 = vpack.c.b16 %v1243, %v1242
        %v1258 = vpack.c.b16 %v1245, %v1244
        %v1259 = vpack.c.b16 %v1247, %v1246
        %v1260 = vpack.c.b16 %v1249, %v1248
        %v1261 = vpack.c.b16 %v1251, %v1250
        %v1262 = vpack.c.b16 %v1253, %v1252
        %v1263 = vpack.c.b16 %v1255, %v1254
        %1272 = vmatprep.subr.bf16.mxu0 0
        %1273 = vmatpush1.bf16.msra.mxu0 %v1263
        %1274 = vmatprep.subr.bf16.mxu0 0
        %1275 = vmatpush1.bf16.msra.mxu0 %v1262
        %1276 = vmatprep.subr.bf16.mxu0 0
        %1277 = vmatpush1.bf16.msra.mxu0 %v1261
        %1278 = vmatprep.subr.bf16.mxu0 0
        %1279 = vmatpush1.bf16.msra.mxu0 %v1260
        %1280 = vmatprep.subr.bf16.mxu0 0
        %1281 = vmatpush1.bf16.msra.mxu0 %v1259
        %1282 = vmatprep.subr.bf16.mxu0 0
        %1283 = vmatpush1.bf16.msra.mxu0 %v1258
        %1284 = vmatprep.subr.bf16.mxu0 0
        %1285 = vmatpush1.bf16.msra.mxu0 %v1257
        %1286 = vmatprep.subr.bf16.mxu0 0
        %1287 = vmatpush1.bf16.msra.mxu0 %v1256
        %1288 = vmatprep.subr.bf16.mxu0 0
        %1289 = vmatpush2.bf16.msra.mxu0 0
        %1290 = vmatprep.subr.bf16.mxu0 0
        %1291 = vmatpush2.bf16.msra.mxu0 0
        %1292 = vmatprep.subr.bf16.mxu0 0
        %1293 = vmatpush2.bf16.msra.mxu0 0
        %1294 = vmatprep.subr.bf16.mxu0 0
        %1295 = vmatpush2.bf16.msra.mxu0 0
        %1296 = vmatprep.subr.bf16.mxu0 0
        %1297 = vmatpush2.bf16.msra.mxu0 0
        %1298 = vmatprep.subr.bf16.mxu0 0
        %1299 = vmatpush2.bf16.msra.mxu0 0
        %1300 = vmatprep.subr.bf16.mxu0 0
        %1301 = vmatpush2.bf16.msra.mxu0 0
        %1302 = vmatprep.subr.bf16.mxu0 0
        %1303 = vmatpush2.bf16.msra.mxu0 0
        %1304 = vmatprep.mubr.bf16.mxu0 0
        %1305 = vmatmul.mubr.bf16.gmra.mxu0 %v1199
        %v1306 = vpop.f32.mrf.mxu0
        %v1307 = vadd.f32 0.0, %v1306
        %v1308 = vpop.f32.mrf.mxu0
        %v1309 = vpop.f32.mrf.mxu0
        %v1310 = vadd.f32 0.0, %v1309
        %v1311 = vpop.f32.mrf.mxu0
        %1312 = vmatprep.mubr.bf16.mxu0 0
        %1313 = vmatmul.mubr.bf16.gmra.mxu0 %v1200
        %v1314 = vpop.f32.mrf.mxu0
        %v1315 = vadd.f32 0.0, %v1314
        %v1316 = vpop.f32.mrf.mxu0
        %v1317 = vpop.f32.mrf.mxu0
        %v1318 = vadd.f32 0.0, %v1317
        %v1319 = vpop.f32.mrf.mxu0
        %1320 = vmatprep.mubr.bf16.mxu0 0
        %1321 = vmatmul.mubr.bf16.gmra.mxu0 %v1201
        %v1322 = vpop.f32.mrf.mxu0
        %v1323 = vadd.f32 0.0, %v1322
        %v1324 = vpop.f32.mrf.mxu0
        %v1325 = vpop.f32.mrf.mxu0
        %v1326 = vadd.f32 0.0, %v1325
        %v1327 = vpop.f32.mrf.mxu0
        %1328 = vmatprep.mubr.bf16.mxu0 0
        %1329 = vmatmul.mubr.bf16.gmra.mxu0 %v1202
        %v1330 = vpop.f32.mrf.mxu0
        %v1331 = vadd.f32 0.0, %v1330
        %v1332 = vpop.f32.mrf.mxu0
        %v1333 = vpop.f32.mrf.mxu0
        %v1334 = vadd.f32 0.0, %v1333
        %v1335 = vpop.f32.mrf.mxu0
        %1336 = vmatprep.mubr.bf16.mxu0 0
        %1337 = vmatmul.mubr.bf16.gmra.mxu0 %v1203
        %v1338 = vpop.f32.mrf.mxu0
        %v1339 = vadd.f32 0.0, %v1338
        %v1340 = vpop.f32.mrf.mxu0
        %v1341 = vpop.f32.mrf.mxu0
        %v1342 = vadd.f32 0.0, %v1341
        %v1343 = vpop.f32.mrf.mxu0
        %1344 = vmatprep.mubr.bf16.mxu0 0
        %1345 = vmatmul.mubr.bf16.gmra.mxu0 %v1204
        %v1346 = vpop.f32.mrf.mxu0
        %v1347 = vadd.f32 0.0, %v1346
        %v1348 = vpop.f32.mrf.mxu0
        %v1349 = vpop.f32.mrf.mxu0
        %v1350 = vadd.f32 0.0, %v1349
        %v1351 = vpop.f32.mrf.mxu0
        %1352 = vmatprep.mubr.bf16.mxu0 0
        %1353 = vmatmul.mubr.bf16.gmra.mxu0 %v1205
        %v1354 = vpop.f32.mrf.mxu0
        %v1355 = vadd.f32 0.0, %v1354
        %v1356 = vpop.f32.mrf.mxu0
        %v1357 = vpop.f32.mrf.mxu0
        %v1358 = vadd.f32 0.0, %v1357
        %v1359 = vpop.f32.mrf.mxu0
        %1360 = vmatprep.mubr.bf16.mxu0 0
        %1361 = vmatmul.mubr.bf16.gmra.mxu0 %v1206
        %v1362 = vpop.f32.mrf.mxu0
        %v1363 = vadd.f32 0.0, %v1362
        %v1364 = vpop.f32.mrf.mxu0
        %v1365 = vpop.f32.mrf.mxu0
        %v1366 = vadd.f32 0.0, %v1365
        %v1367 = vpop.f32.mrf.mxu0
        %1368 = vdwg.mxu0
        %v1369 = vpack.c.bf16 %v1310, %v1307
        %v1370 = vpack.c.bf16 %v1318, %v1315
        %v1371 = vpack.c.bf16 %v1326, %v1323
        %v1372 = vpack.c.bf16 %v1334, %v1331
        %v1373 = vpack.c.bf16 %v1342, %v1339
        %v1374 = vpack.c.bf16 %v1350, %v1347
        %v1375 = vpack.c.bf16 %v1358, %v1355
        %v1376 = vpack.c.bf16 %v1366, %v1363
        %v1377 = vlaneseq
        %v1378 = vshrl.u32 %v1377, 7
        %v1379 = vsub.s32 3, %v1378
        %v1380 = vrot.slane %v314, %v1379
        %1381 = vmatprep.subr.bf16.mxu0 0
        %1382 = vmatpush1.bf16.msra.mxu0 %v1376
        %1383 = vmatprep.subr.bf16.mxu0 0
        %1384 = vmatpush1.bf16.msra.mxu0 %v1375
        %1385 = vmatprep.subr.bf16.mxu0 0
        %1386 = vmatpush1.bf16.msra.mxu0 %v1374
        %1387 = vmatprep.subr.bf16.mxu0 0
        %1388 = vmatpush1.bf16.msra.mxu0 %v1373
        %1389 = vmatprep.subr.bf16.mxu0 0
        %1390 = vmatpush1.bf16.msra.mxu0 %v1372
        %1391 = vmatprep.subr.bf16.mxu0 0
        %1392 = vmatpush1.bf16.msra.mxu0 %v1371
        %1393 = vmatprep.subr.bf16.mxu0 0
        %1394 = vmatpush1.bf16.msra.mxu0 %v1370
        %1395 = vmatprep.subr.bf16.mxu0 0
        %1396 = vmatpush1.bf16.msra.mxu0 %v1369
        %1397 = vmatprep.subr.bf16.mxu0 0
        %1398 = vmatpush2.bf16.msra.mxu0 0
        %1399 = vmatprep.subr.bf16.mxu0 0
        %1400 = vmatpush2.bf16.msra.mxu0 0
        %1401 = vmatprep.subr.bf16.mxu0 0
        %1402 = vmatpush2.bf16.msra.mxu0 0
        %1403 = vmatprep.subr.bf16.mxu0 0
        %1404 = vmatpush2.bf16.msra.mxu0 0
        %1405 = vmatprep.subr.bf16.mxu0 0
        %1406 = vmatpush2.bf16.msra.mxu0 0
        %1407 = vmatprep.subr.bf16.mxu0 0
        %1408 = vmatpush2.bf16.msra.mxu0 0
        %1409 = vmatprep.subr.bf16.mxu0 0
        %1410 = vmatpush2.bf16.msra.mxu0 0
        %1411 = vmatprep.subr.bf16.mxu0 0
        %1412 = vmatpush2.bf16.msra.mxu0 0
        %1413 = vmatprep.mubr.bf16.mxu0 0
        %1414 = vmatmul.mubr.bf16.gmra.mxu0 %v775
        %v1415 = vpop.f32.mrf.mxu0
        %v1416 = vadd.f32 %v1380, %v1415
        %v1417 = vpop.f32.mrf.mxu0
        %v1418 = vpop.f32.mrf.mxu0
        %v1419 = vadd.f32 %v1380, %v1418
        %v1420 = vpop.f32.mrf.mxu0
        %1421 = vmatprep.mubr.bf16.mxu0 0
        %1422 = vmatmul.mubr.bf16.gmra.mxu0 %v776
        %v1423 = vpop.f32.mrf.mxu0
        %v1424 = vadd.f32 %v1380, %v1423
        %v1425 = vpop.f32.mrf.mxu0
        %v1426 = vpop.f32.mrf.mxu0
        %v1427 = vadd.f32 %v1380, %v1426
        %v1428 = vpop.f32.mrf.mxu0
        %1429 = vmatprep.mubr.bf16.mxu0 0
        %1430 = vmatmul.mubr.bf16.gmra.mxu0 %v777
        %v1431 = vpop.f32.mrf.mxu0
        %v1432 = vadd.f32 %v1380, %v1431
        %v1433 = vpop.f32.mrf.mxu0
        %v1434 = vpop.f32.mrf.mxu0
        %v1435 = vadd.f32 %v1380, %v1434
        %v1436 = vpop.f32.mrf.mxu0
        %1437 = vmatprep.mubr.bf16.mxu0 0
        %1438 = vmatmul.mubr.bf16.gmra.mxu0 %v778
        %v1439 = vpop.f32.mrf.mxu0
        %v1440 = vadd.f32 %v1380, %v1439
        %v1441 = vpop.f32.mrf.mxu0
        %v1442 = vpop.f32.mrf.mxu0
        %v1443 = vadd.f32 %v1380, %v1442
        %v1444 = vpop.f32.mrf.mxu0
        %1445 = vmatprep.mubr.bf16.mxu0 0
        %1446 = vmatmul.mubr.bf16.gmra.mxu0 %v779
        %v1447 = vpop.f32.mrf.mxu0
        %v1448 = vadd.f32 %v1380, %v1447
        %v1449 = vpop.f32.mrf.mxu0
        %v1450 = vpop.f32.mrf.mxu0
        %v1451 = vadd.f32 %v1380, %v1450
        %v1452 = vpop.f32.mrf.mxu0
        %1453 = vmatprep.mubr.bf16.mxu0 0
        %1454 = vmatmul.mubr.bf16.gmra.mxu0 %v780
        %v1455 = vpop.f32.mrf.mxu0
        %v1456 = vadd.f32 %v1380, %v1455
        %v1457 = vpop.f32.mrf.mxu0
        %v1458 = vpop.f32.mrf.mxu0
        %v1459 = vadd.f32 %v1380, %v1458
        %v1460 = vpop.f32.mrf.mxu0
        %1461 = vmatprep.mubr.bf16.mxu0 0
        %1462 = vmatmul.mubr.bf16.gmra.mxu0 %v781
        %v1463 = vpop.f32.mrf.mxu0
        %v1464 = vadd.f32 %v1380, %v1463
        %v1465 = vpop.f32.mrf.mxu0
        %v1466 = vpop.f32.mrf.mxu0
        %v1467 = vadd.f32 %v1380, %v1466
        %v1468 = vpop.f32.mrf.mxu0
        %1469 = vmatprep.mubr.bf16.mxu0 0
        %1470 = vmatmul.mubr.bf16.gmra.mxu0 %v782
        %v1471 = vpop.f32.mrf.mxu0
        %v1472 = vadd.f32 %v1380, %v1471
        %v1473 = vpop.f32.mrf.mxu0
        %v1474 = vpop.f32.mrf.mxu0
        %v1475 = vadd.f32 %v1380, %v1474
        %v1476 = vpop.f32.mrf.mxu0
        %1477 = vdwg.mxu0
        %v1478 = vmax.f32 %v1416, 0.0
        %v1479 = vmax.f32 %v1419, 0.0
        %v1480 = vmax.f32 %v1424, 0.0
        %v1481 = vmax.f32 %v1427, 0.0
        %v1482 = vmax.f32 %v1432, 0.0
        %v1483 = vmax.f32 %v1435, 0.0
        %v1484 = vmax.f32 %v1440, 0.0
        %v1485 = vmax.f32 %v1443, 0.0
        %v1486 = vmax.f32 %v1448, 0.0
        %v1487 = vmax.f32 %v1451, 0.0
        %v1488 = vmax.f32 %v1456, 0.0
        %v1489 = vmax.f32 %v1459, 0.0
        %v1490 = vmax.f32 %v1464, 0.0
        %v1491 = vmax.f32 %v1467, 0.0
        %v1492 = vmax.f32 %v1472, 0.0
        %v1493 = vmax.f32 %v1475, 0.0
        %v1494 = vpack.c.bf16 %v1479, %v1478
        %v1495 = vpack.c.bf16 %v1481, %v1480
        %v1496 = vpack.c.bf16 %v1483, %v1482
        %v1497 = vpack.c.bf16 %v1485, %v1484
        %v1498 = vpack.c.bf16 %v1487, %v1486
        %v1499 = vpack.c.bf16 %v1489, %v1488
        %v1500 = vpack.c.bf16 %v1491, %v1490
        %v1501 = vpack.c.bf16 %v1493, %v1492
        %v1502 = vld [vmem:[%s311] sm:$0xf]
        %v1503 = vld [vmem:[%s311 + $0x4] sm:$0xf]
        %v1506 = vunpack.c.l.b16 %v1502
        %v1507 = vunpack.c.l.b16 %v1503
        %v1508 = vpack.c.b16 %v1507, %v1506
        %1510 = vmatprep.subr.bf16.mxu0 0
        %1511 = vmatpush1.bf16.msra.mxu0 %v1501
        %1512 = vmatprep.subr.bf16.mxu0 0
        %1513 = vmatpush1.bf16.msra.mxu0 %v1500
        %1514 = vmatprep.subr.bf16.mxu0 0
        %1515 = vmatpush1.bf16.msra.mxu0 %v1499
        %1516 = vmatprep.subr.bf16.mxu0 0
        %1517 = vmatpush1.bf16.msra.mxu0 %v1498
        %1518 = vmatprep.subr.bf16.mxu0 0
        %1519 = vmatpush1.bf16.msra.mxu0 %v1497
        %1520 = vmatprep.subr.bf16.mxu0 0
        %1521 = vmatpush1.bf16.msra.mxu0 %v1496
        %1522 = vmatprep.subr.bf16.mxu0 0
        %1523 = vmatpush1.bf16.msra.mxu0 %v1495
        %1524 = vmatprep.subr.bf16.mxu0 0
        %1525 = vmatpush1.bf16.msra.mxu0 %v1494
        %1526 = vmatprep.subr.bf16.mxu0 0
        %1527 = vmatpush2.bf16.msra.mxu0 0
        %1528 = vmatprep.subr.bf16.mxu0 0
        %1529 = vmatpush2.bf16.msra.mxu0 0
        %1530 = vmatprep.subr.bf16.mxu0 0
        %1531 = vmatpush2.bf16.msra.mxu0 0
        %1532 = vmatprep.subr.bf16.mxu0 0
        %1533 = vmatpush2.bf16.msra.mxu0 0
        %1534 = vmatprep.subr.bf16.mxu0 0
        %1535 = vmatpush2.bf16.msra.mxu0 0
        %1536 = vmatprep.subr.bf16.mxu0 0
        %1537 = vmatpush2.bf16.msra.mxu0 0
        %1538 = vmatprep.subr.bf16.mxu0 0
        %1539 = vmatpush2.bf16.msra.mxu0 0
        %1540 = vmatprep.subr.bf16.mxu0 0
        %1541 = vmatpush2.bf16.msra.mxu0 0
        %1542 = vmatprep.mubr.bf16.mxu0 0
        %1543 = vmatmul.mubr.bf16.gmra.mxu0 %v1508
        %v1544 = vpop.f32.mrf.mxu0
        %v1545 = vadd.f32 0.0, %v1544
        %v1546 = vpop.f32.mrf.mxu0
        %v1547 = vpop.f32.mrf.mxu0
        %v1548 = vadd.f32 0.0, %v1547
        %v1549 = vpop.f32.mrf.mxu0
        %1550 = vdwg.mxu0
        %v1551 = vlaneseq
        %v1552 = vshrl.u32 %v1551, 7
        %v1553 = vsub.s32 4, %v1552
        %v1554 = vrot.slane %v314, %v1553
        %v1555 = vmul.f32 %v1545, %v1554
        %v1556 = vmul.f32 %v1548, %v1554
        %1557 = vadd.xlane.f32.xlu0 %v1555
        %v1558 = vpop.xlane.xlu0 %1557
        %1559 = vadd.xlane.f32.xlu0 %v1556
        %v1560 = vpop.xlane.xlu0 %1559
        %v1561 = vlaneseq
        %v1562 = vshrl.u32 %v1561, 7
        %v1563 = vsub.s32 5, %v1562
        %v1564 = vrot.slane %v314, %v1563
        %v1565 = vadd.f32 %v1558, %v1564
        %v1566 = vadd.f32 %v1560, %v1564
        %1567 = vst [vmem:[%s300] sm:$0xff] %v1565
        %1568 = vst [vmem:[%s300 + $0x8] sm:$0xff] %v1566
        %s1569 = sand.u32 %s172, 1
        %s1570 = scalar_lea.sflag [#allocation4], %s1569
        %s1571 = sand.u32 %s172, 1
        %s1572 = smul.addr %s1571, 16
        %s1573 = scalar_lea.vmem [#allocation5], %s1572
        // Predicated region
        $region49: #{tpu_custom_call.1} parent=43 // pred_check
          %p1574 = pneg %p182
        $region50: #{tpu_custom_call.1} parent=43 // pred_check_branch
          %1576 = sbr.rel (%p1574) target = $region52
        $region51: #{tpu_custom_call.1} parent=43 // pred_region
          %s1577 = smul.u32 2, %s23
          %s1579 = ssub.s32 256, 256
          %1580 = vsyncadd %s1570, %s1579
          %s1581 = smul.addr %s1577, 128
          %s1582 = scalar_lea.hbm %s6, %s1581
          %s1583 = sshll.u32 %s1573, 4
          %s1584 = int_to_ptr.vmem [resolvable:$true] %s1583
          %1589 = dma.vmem_to_hbm [thread:$0]  %s1584, 256, %s1582, %s1570, 128, 128, 8
        $region52: #{tpu_custom_call.1} parent=43 // pred_fallthru
          _
      $region44: #{tpu_custom_call.1} parent=5 // pred_fallthru
        _
      %p1590 = scmp.le.s32.totalorder 2, %s18
      // Predicated region
      $region53: #{tpu_custom_call.1} parent=5 // pred_check
        %p1591 = pneg %p1590
      $region54: #{tpu_custom_call.1} parent=5 // pred_check_branch
        %1593 = sbr.rel (%p1591) target = $region56
      $region55: #{tpu_custom_call.1} parent=5 // pred_region
        %s1594 = ssub.s32 %s18, 2
        // Predicated region
        $region57: #{tpu_custom_call.1} parent=55 // pred_check
          %p1595 = pneg %p188
        $region58: #{tpu_custom_call.1} parent=55 // pred_check_branch
          %1597 = sbr.rel (%p1595) target = $region60
        $region59: #{tpu_custom_call.1} parent=55 // pred_region
          %s1598 = sand.u32 %s173, 1
          %s1599 = scalar_lea.sflag [#allocation4], %s1598
          %s1600 = sand.u32 %s173, 1
          %s1601 = smul.addr %s1600, 16
          %s1602 = scalar_lea.vmem [#allocation5], %s1601
          %1603 = dma.done %s1599, 256
        $region60: #{tpu_custom_call.1} parent=55 // pred_fallthru
          _
      $region56: #{tpu_custom_call.1} parent=5 // pred_fallthru
        _
    $region6: #{tpu_custom_call.1} parent=1 // loop_footer
      %s22 = sadd.s32 1, %s18
    $region7: #{tpu_custom_call.1} parent=1 // loop_footer_branch
      %17 = sbr.rel target = $region3
    $region8: #{tpu_custom_call.1} parent=1 // loop_exit
      _
    %1604 = vsyncpa [#allocation3], 1
    %s1605 = scalar_lea.sflag [#allocation3], 1
    %1606 = vsyncpa %s1605, 1
    %1607 = vsyncpa [#allocation4], 1
    %s1608 = scalar_lea.sflag [#allocation4], 1
    %1609 = vsyncpa %s1608, 1

</llo_original>
